<compile_context>
chip_gen: v5e
topology: v5e:2x2
jax: 0.10.0
libtpu: 0.0.40
codegen_flags: <defaults>
</compile_context>

<pallas_src>
import math
from functools import partial

import jax
import jax.numpy as jnp
from jax import lax
from jax.experimental import pallas as pl
from jax.experimental.pallas import tpu as pltpu

_INV_SQRT2 = 1.0 / math.sqrt(2.0)


def _gelu_exact(h):
    # torch.nn.GELU default (exact erf form).  v5e-only option: tanh approximation
    # moves this onto the idle EUP slot but changes numerics -> not done here.
    return 0.5 * h * (1.0 + lax.erf(h * _INV_SQRT2))


# ----------------------------- Pallas kernel -------------------------------

def _grapher_kernel(H, W, D, K, C, x_ref, w_ref, b_ref, o_ref):
    # x_ref: (C, S)   one batch: channels x flattened spatial, S = H*W*D
    # w_ref: (C, 4C)  packed folded conv+BN weights [w1 | wg(2C) | w2]
    # b_ref: (C, 3)   packed folded biases          [b1 | bg | b2]
    # o_ref: (C, S)
    S = H * W * D

    w1 = w_ref[:, 0:C]
    wg = w_ref[:, C:3 * C]
    w2 = w_ref[:, 3 * C:4 * C]
    b1 = b_ref[:, 0:1]
    bg = b_ref[:, 1:2]
    b2 = b_ref[:, 2:3]

    # fc1: 1x1x1 conv (+BN folded) == channel matmul over the lane-dense slab.
    # x_ref is read here and again only at the residual add (short live range).
    y1 = jnp.dot(w1, x_ref[...], preferred_element_type=jnp.float32) + b1

    # Lane index, computed in-kernel (no extra HBM operand); hoisted once.
    lane = lax.broadcasted_iota(jnp.int32, (C, S), 1)

    # ---- MRConv4d: x_j = max over strided spatial shifts of (y1 - roll(y1)) ----
    def axis_updates(x_j, dim, inner):
        # Shifts i in {K, 2K, ...} < dim along one spatial axis whose lane stride
        # is `inner`.  Rolling along that axis wraps inside contiguous lane groups
        # of size dim*inner (== S for the outermost spatial axis -> plain roll).
        group = dim * inner
        shifts = list(range(K, dim, K))
        if not shifts:
            return x_j
        if group == S:                                   # H axis: plain lane rotate
            for i in shifts:
                rolled = pltpu.roll(y1, i * inner, axis=1)        # XLU
                x_j = jnp.maximum(x_j, y1 - rolled)
            return x_j
        # Grouped roll: two full-row XLU rotates + one lane-position select.
        # Position mask source hoisted out of the unrolled loop (no per-shift
        # broadcast; compares are plain (C,S) VPU ops).
        if group & (group - 1) == 0:
            pos = lane & (group - 1)                     # power-of-two fast path
        else:
            pos = lane % group  # TODO(synk): general (non-pow2) dims; unused in demo
        for i in shifts:
            r = i * inner
            lo = pltpu.roll(y1, r, axis=1)               # valid where pos >= r
            hi = pltpu.roll(y1, S + r - group, axis=1)   # valid where pos <  r
            x_j = jnp.maximum(x_j, y1 - jnp.where(pos >= r, lo, hi))
        return x_j

    x_j = jnp.zeros_like(y1)
    x_j = axis_updates(x_j, H, W * D)     # shifts along H
    x_j = axis_updates(x_j, W, D)         # shifts along W
    x_j = axis_updates(x_j, D, 1)         # shifts along D

    # graph-conv 1x1x1 conv on cat([y1, x_j], channel) (+BN folded) + GELU.
    # Sublane concat (C is a multiple of 8 -> free relabeling) + single fused dot.
    cat = jnp.concatenate([y1, x_j], axis=0)             # (2C, S)
    h = _gelu_exact(jnp.dot(wg, cat, preferred_element_type=jnp.float32) + bg)

    # fc2 (+BN folded) + residual with the ORIGINAL Grapher input.
    y2 = jnp.dot(w2, h, preferred_element_type=jnp.float32) + b2
    o_ref[...] = (y2 + x_ref[...]).astype(o_ref.dtype)


def _grapher_pallas(x3, w_all, b_all, *, H, W, D, K):
    """x3: (B, C, S) float32 with S = H*W*D (free view of NCDHW)."""
    B, C, S = x3.shape
    assert S == H * W * D

    n_shifts = sum(len(range(K, d, K)) for d in (H, W, D))
    flops = B * S * (8 * C * C + C * (5 * n_shifts + 10))
    bytes_accessed = 4 * (2 * B * C * S + 4 * C * C + 3 * C)
    cost = pl.CostEstimate(flops=int(flops),
                           transcendentals=int(B * C * S),
                           bytes_accessed=int(bytes_accessed))

    kernel = partial(_grapher_kernel, H, W, D, K, C)

    return pl.pallas_call(
        kernel,
        out_shape=jax.ShapeDtypeStruct((B, C, S), jnp.float32),
        grid_spec=pltpu.PrefetchScalarGridSpec(
            num_scalar_prefetch=0,
            grid=(B,),                                   # one maximal tile per batch
            in_specs=[
                pl.BlockSpec((None, C, S), lambda b: (b, 0, 0)),   # x (lane-dense slab)
                pl.BlockSpec((C, 4 * C), lambda b: (0, 0)),        # packed weights
                pl.BlockSpec((C, 3), lambda b: (0, 0)),            # packed biases
            ],
            out_specs=pl.BlockSpec((None, C, S), lambda b: (b, 0, 0)),
        ),
        compiler_params=pltpu.CompilerParams(
            dimension_semantics=("parallel",)),          # megacore shards batches (v7x)
        cost_estimate=cost,
    )(x3, w_all, b_all)


# ------------------------- parameter setup (glue) --------------------------

def _fold_conv_bn(conv_w, conv_b, gamma, beta, mean, var, eps=1e-5):
    """Fold eval-mode BatchNorm into a 1x1x1 conv.

    conv_w: (C_out, C_in) (1x1x1 kernel squeezed).
    Returns W_eff: (C_out, C_in), b_eff: (C_out, 1) for the W @ X orientation.
    """
    scale = gamma / jnp.sqrt(var + eps)                  # (C_out,)
    w_eff = conv_w * scale[:, None]                      # (C_out, C_in)
    b_eff = (conv_b - mean) * scale + beta               # (C_out,)
    return w_eff.astype(jnp.float32), b_eff[:, None].astype(jnp.float32)


def make_grapher_params(key, channels, eps=1e-5):
    C = channels
    ks = jax.random.split(key, 9)

    def conv_init(kw, kb, c_out, c_in):
        bound = 1.0 / math.sqrt(c_in)                    # 1x1x1 kernel -> fan_in = c_in
        w = jax.random.uniform(kw, (c_out, c_in), minval=-bound, maxval=bound,
                               dtype=jnp.float32)
        b = jax.random.uniform(kb, (c_out,), minval=-bound, maxval=bound,
                               dtype=jnp.float32)
        return w, b

    def bn_init(k, c):
        k1, k2, k3, k4 = jax.random.split(k, 4)
        g = 1.0 + 0.1 * jax.random.normal(k1, (c,), jnp.float32)
        b = 0.1 * jax.random.normal(k2, (c,), jnp.float32)
        m = 0.05 * jax.random.normal(k3, (c,), jnp.float32)
        v = 1.0 + 0.1 * jnp.abs(jax.random.normal(k4, (c,), jnp.float32))
        return g, b, m, v

    cw1, cb1 = conv_init(ks[0], ks[1], C, C)             # fc1 conv
    cwg, cbg = conv_init(ks[2], ks[3], C, 2 * C)         # graph-conv conv (2C -> C)
    cw2, cb2 = conv_init(ks[4], ks[5], C, C)             # fc2 conv

    w1, b1 = _fold_conv_bn(cw1, cb1, *bn_init(ks[6], C), eps=eps)
    wg, bg = _fold_conv_bn(cwg, cbg, *bn_init(ks[7], 2 * C if False else C), eps=eps)
    w2, b2 = _fold_conv_bn(cw2, cb2, *bn_init(ks[8], C), eps=eps)
    return w1, b1, wg, bg, w2, b2                        # wg kept unsplit: (C, 2C)


def grapher_forward(x5, params, *, K):
    """x5: (B, C, H, W, D) float32 (PyTorch Conv3d layout). Returns same shape."""
    w1, b1, wg, bg, w2, b2 = params
    B, C, H, W, D = x5.shape
    S = H * W * D
    x3 = x5.reshape(B, C, S)                             # free view, no transpose
    w_all = jnp.concatenate([w1, wg, w2], axis=1)        # (C, 4C) packed weights
    b_all = jnp.concatenate([b1, bg, b2], axis=1)        # (C, 3)  packed biases
    y3 = _grapher_pallas(x3, w_all, b_all, H=H, W=W, D=D, K=K)
    return y3.reshape(B, C, H, W, D)


# ------------------------------ reference ----------------------------------

def grapher_reference(x5, params, K):
    """Plain-JAX Grapher forward (eval-mode BN folded), rolls on the 5-D array."""
    w1, b1, wg, bg, w2, b2 = params
    B, C, H, W, D = x5.shape
    hp = lax.Precision.HIGHEST

    def pconv(w, b, t):
        return (jnp.einsum('oc,bchwd->bohwd', w, t, precision=hp)
                + b.reshape(1, -1, 1, 1, 1))

    y1 = pconv(w1, b1, x5)                               # fc1
    x_j = jnp.zeros_like(y1)
    for axis, dim in ((2, H), (3, W), (4, D)):           # MRConv4d shift-max
        for i in range(K, dim, K):
            x_j = jnp.maximum(x_j, y1 - jnp.roll(y1, i, axis=axis))
    cat = jnp.concatenate([y1, x_j], axis=1)             # channel concat
    h = _gelu_exact(jnp.einsum('oc,bchwd->bohwd', wg, cat, precision=hp)
                    + bg.reshape(1, -1, 1, 1, 1))
    y2 = pconv(w2, b2, h)                                # fc2
    return y2 + x5                                       # residual (drop_path = Identity)


# -------------------------------- main --------------------------------------

if __name__ == "__main__":
    key = jax.random.PRNGKey(0)
    k_x, k_p = jax.random.split(key)

    # Grapher(in_channels=16, K=2) on a (B, C, H, W, D) = (2, 16, 8, 8, 8) volume.
    # K=2 so the graph conv's shift loops actually run (shifts {2,4,6} per axis);
    # B=2 keeps both v7x TensorCores fed.
    B, C, H, W, D, K = 2, 16, 8, 8, 8, 2

    x = jax.random.normal(k_x, (B, C, H, W, D), dtype=jnp.float32)
    params = make_grapher_params(k_p, C)

    fwd = jax.jit(partial(grapher_forward, K=K))
    out = jax.block_until_ready(fwd(x, params))

    ref = grapher_reference(x, params, K)
    assert out.shape == x.shape
    err = float(jnp.max(jnp.abs(out - ref)))
    assert jnp.allclose(out, ref, atol=1e-3, rtol=1e-3), f"max err {err}"

    print("KERNEL_OK")
</pallas_src>

<mosaic_0001>
module attributes {stable_mosaic.version = 11 : i64} {
  func.func @_grapher_kernel(%arg0: i32, %arg1: memref<1x16x512xf32, #tpu.memory_space<vmem>>, %arg2: memref<16x64xf32, #tpu.memory_space<vmem>>, %arg3: memref<16x3xf32, #tpu.memory_space<vmem>>, %arg4: memref<1x16x512xf32, #tpu.memory_space<vmem>>) attributes {dimension_semantics = [#tpu.dimension_semantics<parallel>], iteration_bounds = array<i64: 2>, scalar_prefetch = 0 : i64, scratch_operands = 0 : i64, tpu.core_type = #tpu.core_type<tc>, window_params = [{transform_indices = @transform_0, window_bounds = array<i64: 1, 16, 512>}, {pipeline_mode = #tpu.pipeline_mode<synchronous>, transform_indices = @transform_1, window_bounds = array<i64: 16, 64>}, {pipeline_mode = #tpu.pipeline_mode<synchronous>, transform_indices = @transform_2, window_bounds = array<i64: 16, 3>}, {transform_indices = @transform_3, window_bounds = array<i64: 1, 16, 512>}]} {
    %c0 = arith.constant 0 : index
    %c0_0 = arith.constant 0 : index
    %0 = vector.load %arg2[%c0, %c0_0] : memref<16x64xf32, #tpu.memory_space<vmem>>, vector<16x16xf32>
    %c0_1 = arith.constant 0 : index
    %c16 = arith.constant 16 : index
    %1 = vector.load %arg2[%c0_1, %c16] : memref<16x64xf32, #tpu.memory_space<vmem>>, vector<16x32xf32>
    %c0_2 = arith.constant 0 : index
    %c48 = arith.constant 48 : index
    %2 = vector.load %arg2[%c0_2, %c48] : memref<16x64xf32, #tpu.memory_space<vmem>>, vector<16x16xf32>
    %c0_3 = arith.constant 0 : index
    %c0_4 = arith.constant 0 : index
    %3 = vector.load %arg3[%c0_3, %c0_4] : memref<16x3xf32, #tpu.memory_space<vmem>>, vector<16x1xf32>
    %c0_5 = arith.constant 0 : index
    %c1 = arith.constant 1 : index
    %4 = vector.load %arg3[%c0_5, %c1] : memref<16x3xf32, #tpu.memory_space<vmem>>, vector<16x1xf32>
    %c0_6 = arith.constant 0 : index
    %c2 = arith.constant 2 : index
    %5 = vector.load %arg3[%c0_6, %c2] : memref<16x3xf32, #tpu.memory_space<vmem>>, vector<16x1xf32>
    %c0_7 = arith.constant 0 : index
    %c0_8 = arith.constant 0 : index
    %c0_9 = arith.constant 0 : index
    %6 = vector.load %arg1[%c0_7, %c0_8, %c0_9] : memref<1x16x512xf32, #tpu.memory_space<vmem>>, vector<1x16x512xf32>
    %7 = vector.shape_cast %6 : vector<1x16x512xf32> to vector<16x512xf32>
    %cst = arith.constant dense<0.000000e+00> : vector<16x512xf32>
    %8 = tpu.matmul %0, %7, %cst {dimension_numbers = #tpu.dot_dimension_numbers<[1], [0], [0], [1], [0, 0, 1, 1], [], []>} : vector<16x16xf32>, vector<16x512xf32>, vector<16x512xf32> -> vector<16x512xf32>
    %9 = vector.broadcast %3 : vector<16x1xf32> to vector<16x512xf32>
    %10 = arith.addf %8, %9 : vector<16x512xf32>
    %11 = tpu.iota {dimensions = array<i32: 1>} : vector<16x512xi32>
    %cst_10 = arith.constant 0.000000e+00 : f32
    %12 = vector.broadcast %cst_10 : f32 to vector<16x512xf32>
    %c128_i32 = arith.constant 128 : i32
    %13 = tpu.dynamic_rotate %10 by %c128_i32 dim 1 : vector<16x512xf32>, i32 -> vector<16x512xf32>
    %14 = arith.subf %10, %13 : vector<16x512xf32>
    %15 = arith.maximumf %12, %14 : vector<16x512xf32>
    %c256_i32 = arith.constant 256 : i32
    %16 = tpu.dynamic_rotate %10 by %c256_i32 dim 1 : vector<16x512xf32>, i32 -> vector<16x512xf32>
    %17 = arith.subf %10, %16 : vector<16x512xf32>
    %18 = arith.maximumf %15, %17 : vector<16x512xf32>
    %c384_i32 = arith.constant 384 : i32
    %19 = tpu.dynamic_rotate %10 by %c384_i32 dim 1 : vector<16x512xf32>, i32 -> vector<16x512xf32>
    %20 = arith.subf %10, %19 : vector<16x512xf32>
    %21 = arith.maximumf %18, %20 : vector<16x512xf32>
    %c63_i32 = arith.constant 63 : i32
    %22 = vector.broadcast %c63_i32 : i32 to vector<16x512xi32>
    %23 = arith.andi %11, %22 : vector<16x512xi32>
    %c16_i32 = arith.constant 16 : i32
    %24 = tpu.dynamic_rotate %10 by %c16_i32 dim 1 : vector<16x512xf32>, i32 -> vector<16x512xf32>
    %c464_i32 = arith.constant 464 : i32
    %25 = tpu.dynamic_rotate %10 by %c464_i32 dim 1 : vector<16x512xf32>, i32 -> vector<16x512xf32>
    %c16_i32_11 = arith.constant 16 : i32
    %26 = vector.broadcast %c16_i32_11 : i32 to vector<16x512xi32>
    %27 = arith.cmpi sge, %23, %26 : vector<16x512xi32>
    %28 = arith.select %27, %24, %25 : vector<16x512xi1>, vector<16x512xf32>
    %29 = arith.subf %10, %28 : vector<16x512xf32>
    %30 = arith.maximumf %21, %29 : vector<16x512xf32>
    %c32_i32 = arith.constant 32 : i32
    %31 = tpu.dynamic_rotate %10 by %c32_i32 dim 1 : vector<16x512xf32>, i32 -> vector<16x512xf32>
    %c480_i32 = arith.constant 480 : i32
    %32 = tpu.dynamic_rotate %10 by %c480_i32 dim 1 : vector<16x512xf32>, i32 -> vector<16x512xf32>
    %c32_i32_12 = arith.constant 32 : i32
    %33 = vector.broadcast %c32_i32_12 : i32 to vector<16x512xi32>
    %34 = arith.cmpi sge, %23, %33 : vector<16x512xi32>
    %35 = arith.select %34, %31, %32 : vector<16x512xi1>, vector<16x512xf32>
    %36 = arith.subf %10, %35 : vector<16x512xf32>
    %37 = arith.maximumf %30, %36 : vector<16x512xf32>
    %c48_i32 = arith.constant 48 : i32
    %38 = tpu.dynamic_rotate %10 by %c48_i32 dim 1 : vector<16x512xf32>, i32 -> vector<16x512xf32>
    %c496_i32 = arith.constant 496 : i32
    %39 = tpu.dynamic_rotate %10 by %c496_i32 dim 1 : vector<16x512xf32>, i32 -> vector<16x512xf32>
    %c48_i32_13 = arith.constant 48 : i32
    %40 = vector.broadcast %c48_i32_13 : i32 to vector<16x512xi32>
    %41 = arith.cmpi sge, %23, %40 : vector<16x512xi32>
    %42 = arith.select %41, %38, %39 : vector<16x512xi1>, vector<16x512xf32>
    %43 = arith.subf %10, %42 : vector<16x512xf32>
    %44 = arith.maximumf %37, %43 : vector<16x512xf32>
    %c7_i32 = arith.constant 7 : i32
    %45 = vector.broadcast %c7_i32 : i32 to vector<16x512xi32>
    %46 = arith.andi %11, %45 : vector<16x512xi32>
    %c2_i32 = arith.constant 2 : i32
    %47 = tpu.dynamic_rotate %10 by %c2_i32 dim 1 : vector<16x512xf32>, i32 -> vector<16x512xf32>
    %c506_i32 = arith.constant 506 : i32
    %48 = tpu.dynamic_rotate %10 by %c506_i32 dim 1 : vector<16x512xf32>, i32 -> vector<16x512xf32>
    %c2_i32_14 = arith.constant 2 : i32
    %49 = vector.broadcast %c2_i32_14 : i32 to vector<16x512xi32>
    %50 = arith.cmpi sge, %46, %49 : vector<16x512xi32>
    %51 = arith.select %50, %47, %48 : vector<16x512xi1>, vector<16x512xf32>
    %52 = arith.subf %10, %51 : vector<16x512xf32>
    %53 = arith.maximumf %44, %52 : vector<16x512xf32>
    %c4_i32 = arith.constant 4 : i32
    %54 = tpu.dynamic_rotate %10 by %c4_i32 dim 1 : vector<16x512xf32>, i32 -> vector<16x512xf32>
    %c508_i32 = arith.constant 508 : i32
    %55 = tpu.dynamic_rotate %10 by %c508_i32 dim 1 : vector<16x512xf32>, i32 -> vector<16x512xf32>
    %c4_i32_15 = arith.constant 4 : i32
    %56 = vector.broadcast %c4_i32_15 : i32 to vector<16x512xi32>
    %57 = arith.cmpi sge, %46, %56 : vector<16x512xi32>
    %58 = arith.select %57, %54, %55 : vector<16x512xi1>, vector<16x512xf32>
    %59 = arith.subf %10, %58 : vector<16x512xf32>
    %60 = arith.maximumf %53, %59 : vector<16x512xf32>
    %c6_i32 = arith.constant 6 : i32
    %61 = tpu.dynamic_rotate %10 by %c6_i32 dim 1 : vector<16x512xf32>, i32 -> vector<16x512xf32>
    %c510_i32 = arith.constant 510 : i32
    %62 = tpu.dynamic_rotate %10 by %c510_i32 dim 1 : vector<16x512xf32>, i32 -> vector<16x512xf32>
    %c6_i32_16 = arith.constant 6 : i32
    %63 = vector.broadcast %c6_i32_16 : i32 to vector<16x512xi32>
    %64 = arith.cmpi sge, %46, %63 : vector<16x512xi32>
    %65 = arith.select %64, %61, %62 : vector<16x512xi1>, vector<16x512xf32>
    %66 = arith.subf %10, %65 : vector<16x512xf32>
    %67 = arith.maximumf %60, %66 : vector<16x512xf32>
    %68 = tpu.concatenate %10, %67 in 0 : vector<16x512xf32>, vector<16x512xf32> -> vector<32x512xf32>
    %cst_17 = arith.constant dense<0.000000e+00> : vector<16x512xf32>
    %69 = tpu.matmul %1, %68, %cst_17 {dimension_numbers = #tpu.dot_dimension_numbers<[1], [0], [0], [1], [0, 0, 1, 1], [], []>} : vector<16x32xf32>, vector<32x512xf32>, vector<16x512xf32> -> vector<16x512xf32>
    %70 = vector.broadcast %4 : vector<16x1xf32> to vector<16x512xf32>
    %71 = arith.addf %69, %70 : vector<16x512xf32>
    %cst_18 = arith.constant 5.000000e-01 : f32
    %72 = vector.broadcast %cst_18 : f32 to vector<16x512xf32>
    %73 = arith.mulf %72, %71 : vector<16x512xf32>
    %cst_19 = arith.constant 0.707106769 : f32
    %74 = vector.broadcast %cst_19 : f32 to vector<16x512xf32>
    %75 = arith.mulf %71, %74 : vector<16x512xf32>
    %76 = math.erf %75 : vector<16x512xf32>
    %cst_20 = arith.constant 1.000000e+00 : f32
    %77 = vector.broadcast %cst_20 : f32 to vector<16x512xf32>
    %78 = arith.addf %77, %76 : vector<16x512xf32>
    %79 = arith.mulf %73, %78 : vector<16x512xf32>
    %cst_21 = arith.constant dense<0.000000e+00> : vector<16x512xf32>
    %80 = tpu.matmul %2, %79, %cst_21 {dimension_numbers = #tpu.dot_dimension_numbers<[1], [0], [0], [1], [0, 0, 1, 1], [], []>} : vector<16x16xf32>, vector<16x512xf32>, vector<16x512xf32> -> vector<16x512xf32>
    %81 = vector.broadcast %5 : vector<16x1xf32> to vector<16x512xf32>
    %82 = arith.addf %80, %81 : vector<16x512xf32>
    %c0_22 = arith.constant 0 : index
    %c0_23 = arith.constant 0 : index
    %c0_24 = arith.constant 0 : index
    %83 = vector.load %arg1[%c0_22, %c0_23, %c0_24] : memref<1x16x512xf32, #tpu.memory_space<vmem>>, vector<1x16x512xf32>
    %84 = vector.shape_cast %83 : vector<1x16x512xf32> to vector<16x512xf32>
    %85 = arith.addf %82, %84 : vector<16x512xf32>
    %c0_25 = arith.constant 0 : index
    %c0_26 = arith.constant 0 : index
    %c0_27 = arith.constant 0 : index
    %86 = vector.load %arg4[%c0_25, %c0_26, %c0_27] : memref<1x16x512xf32, #tpu.memory_space<vmem>>, vector<1x16x512xf32>
    %87 = vector.shape_cast %86 : vector<1x16x512xf32> to vector<16x512xf32>
    %88 = vector.shape_cast %85 : vector<16x512xf32> to vector<1x16x512xf32>
    tpu.vector_store %arg4[%c0_25, %c0_26, %c0_27], %88 {strides = array<i32>} : memref<1x16x512xf32, #tpu.memory_space<vmem>>, vector<1x16x512xf32>,
    return
  }
  func.func @transform_0(%arg0: i32) -> (i32, i32, i32) {
    %c0_i32 = arith.constant 0 : i32
    %c0_i32_0 = arith.constant 0 : i32
    %c0_i32_1 = arith.constant 0 : i32
    return %arg0, %c0_i32, %c0_i32_0 : i32, i32, i32
  }
  func.func @transform_1(%arg0: i32) -> (i32, i32) {
    %c0_i32 = arith.constant 0 : i32
    %c0_i32_0 = arith.constant 0 : i32
    %c0_i32_1 = arith.constant 0 : i32
    return %c0_i32, %c0_i32_0 : i32, i32
  }
  func.func @transform_2(%arg0: i32) -> (i32, i32) {
    %c0_i32 = arith.constant 0 : i32
    %c0_i32_0 = arith.constant 0 : i32
    %c0_i32_1 = arith.constant 0 : i32
    return %c0_i32, %c0_i32_0 : i32, i32
  }
  func.func @transform_3(%arg0: i32) -> (i32, i32, i32) {
    %c0_i32 = arith.constant 0 : i32
    %c0_i32_0 = arith.constant 0 : i32
    %c0_i32_1 = arith.constant 0 : i32
    return %arg0, %c0_i32, %c0_i32_0 : i32, i32, i32
  }
}

</mosaic_0001>

<llo_original>
// kernel: grapher_forward.1
$region0: #{grapher_forward.1}
  #allocation0 [shape = 'u32[]', space=smem, size = 0x4, offset = 0x4, fixed_abs, tag = 'smem constant byte address 0x4 - core index']
  #allocation1 [shape = 'u32[72,128]{1,0:T(1,128)}', space=vmem, size = 0x9000, scoped, tag = 'internal scratch']
  %s0 = inlined_call_operand.vmem [shape: f32[2,16,512], index: 0, kind: input, shape index: {}]
  %s1 = inlined_call_operand.vmem [shape: f32[16,64], index: 1, kind: input, shape index: {}]
  %s2 = inlined_call_operand.vmem [shape: f32[16,3], index: 2, kind: input, shape index: {}]
  %s3 = inlined_call_operand.vmem [shape: f32[2,16,512], index: 3, kind: output, shape index: {}]
  %s4 = sld [smem:[#allocation0]]
  $region45: #{grapher_forward.1} parent=0
    _
  %s6 = ssub.s32 1, %s4
  %s7 = scalar_select 0, %s6, %s4
  loop: start=0, step=1, limit=4
  $region2: #{grapher_forward.1} parent=0 // loop_pre_header
    _
  $region3: #{grapher_forward.1} parent=0 // loop_header
    %s9 = sphi 0, %s13
    %p10 = scmp.ge.s32.totalorder %s9, 4
    %s19 = sphi 0, %s21
    %s22 = sphi 0, %s19
    %s23 = sphi 0, %s22
    %s39 = sphi 0, %s23
    %s43 = sphi 0, %s43
    %s45 = sphi 0, %s43
    %s46 = sphi 0, %s45
    %s60 = sphi 0, %s46
    %s64 = sphi 0, %s64
    %s66 = sphi 0, %s64
    %s67 = sphi 0, %s66
    %s81 = sphi 0, %s67
    %s87 = sphi 0, %s89
    %s90 = sphi 0, %s87
    %s91 = sphi 0, %s90
    %s107 = sphi 0, %s91
  $region4: #{grapher_forward.1} parent=0 // loop_header_branch
    %12 = sbr.rel (%p10) target = $region8
  $region5: #{grapher_forward.1} parent=0 // loop_body
    %s14 = ssub.s32 %s9, 1
    %s15 = ssub.s32 %s9, 2
    %s16 = sadd.s32 %s9, 1
    %s17 = ssub.s32 %s9, %s16
    %p18 = scmp.eq.s32.totalorder %s17, 0
    %s20 = sadd.s32 %s19, 1
    %s21 = scalar_select %p18, %s19, %s20
    %p24 = pneg %p18
    %p25 = scmp.eq.s32.totalorder %s9, 1
    %p26 = por %p24, %p25
    %p27 = scmp.ne.s32.totalorder %s19, %s22
    %p28 = scmp.eq.s32.totalorder %s9, 0
    %p29 = por %p27, %p28
    %p30 = scmp.ne.s32.totalorder %s19, %s22
    %p31 = scmp.eq.s32.totalorder %s14, 1
    %p32 = por %p30, %p31
    %p33 = scmp.ne.s32.totalorder %s22, %s23
    %p34 = scmp.eq.s32.totalorder %s14, 0
    %p35 = por %p33, %p34
    %p36 = scmp.ne.s32.totalorder %s22, %s23
    %p37 = scmp.eq.s32.totalorder %s15, 1
    %p38 = por %p36, %p37
    %p40 = scmp.ne.s32.totalorder %s23, %s39
    %p41 = scmp.eq.s32.totalorder %s15, 0
    %p42 = por %p40, %p41
    %s44 = sadd.s32 %s43, 1
    %p47 = scmp.eq.s32.totalorder %s9, 1
    %p48 = scmp.ne.s32.totalorder %s43, %s45
    %p49 = scmp.eq.s32.totalorder %s9, 0
    %p50 = por %p48, %p49
    %p51 = scmp.ne.s32.totalorder %s43, %s45
    %p52 = scmp.eq.s32.totalorder %s14, 1
    %p53 = por %p51, %p52
    %p54 = scmp.ne.s32.totalorder %s45, %s46
    %p55 = scmp.eq.s32.totalorder %s14, 0
    %p56 = por %p54, %p55
    %p57 = scmp.ne.s32.totalorder %s45, %s46
    %p58 = scmp.eq.s32.totalorder %s15, 1
    %p59 = por %p57, %p58
    %p61 = scmp.ne.s32.totalorder %s46, %s60
    %p62 = scmp.eq.s32.totalorder %s15, 0
    %p63 = por %p61, %p62
    %s65 = sadd.s32 %s64, 1
    %p68 = scmp.eq.s32.totalorder %s9, 1
    %p69 = scmp.ne.s32.totalorder %s64, %s66
    %p70 = scmp.eq.s32.totalorder %s9, 0
    %p71 = por %p69, %p70
    %p72 = scmp.ne.s32.totalorder %s64, %s66
    %p73 = scmp.eq.s32.totalorder %s14, 1
    %p74 = por %p72, %p73
    %p75 = scmp.ne.s32.totalorder %s66, %s67
    %p76 = scmp.eq.s32.totalorder %s14, 0
    %p77 = por %p75, %p76
    %p78 = scmp.ne.s32.totalorder %s66, %s67
    %p79 = scmp.eq.s32.totalorder %s15, 1
    %p80 = por %p78, %p79
    %p82 = scmp.ne.s32.totalorder %s67, %s81
    %p83 = scmp.eq.s32.totalorder %s15, 0
    %p84 = por %p82, %p83
    %s85 = ssub.s32 %s9, %s16
    %p86 = scmp.eq.s32.totalorder %s85, 0
    %s88 = sadd.s32 %s87, 1
    %s89 = scalar_select %p86, %s87, %s88
    %p92 = pneg %p86
    %p93 = scmp.eq.s32.totalorder %s9, 1
    %p94 = por %p92, %p93
    %p95 = scmp.ne.s32.totalorder %s87, %s90
    %p96 = scmp.eq.s32.totalorder %s9, 0
    %p97 = por %p95, %p96
    %p98 = scmp.ne.s32.totalorder %s87, %s90
    %p99 = scmp.eq.s32.totalorder %s14, 1
    %p100 = por %p98, %p99
    %p101 = scmp.ne.s32.totalorder %s90, %s91
    %p102 = scmp.eq.s32.totalorder %s14, 0
    %p103 = por %p101, %p102
    %p104 = scmp.ne.s32.totalorder %s90, %s91
    %p105 = scmp.eq.s32.totalorder %s15, 1
    %p106 = por %p104, %p105
    %p108 = scmp.ne.s32.totalorder %s91, %s107
    %p109 = scmp.eq.s32.totalorder %s15, 0
    %p110 = por %p108, %p109
    %p111 = scmp.le.s32.totalorder 1, %s9
    %p112 = scmp.lt.s32.totalorder %s9, 3
    %p113 = pnand %p111, %p112
    %p114 = pneg %p113
    // Predicated region
    $region9: #{grapher_forward.1} parent=5 // pred_check
      _
    $region10: #{grapher_forward.1} parent=5 // pred_check_branch
      %116 = sbr.rel (%p113) target = $region12
    $region11: #{grapher_forward.1} parent=5 // pred_region
      %s117 = ssub.s32 %s9, 1
      // Predicated region
      $region13: #{grapher_forward.1} parent=11 // pred_check
        %p118 = pneg %p56
      $region14: #{grapher_forward.1} parent=11 // pred_check_branch
        %120 = sbr.rel (%p118) target = $region16
      $region15: #{grapher_forward.1} parent=11 // pred_region
        _
      $region16: #{grapher_forward.1} parent=11 // pred_fallthru
        _
      // Predicated region
      $region17: #{grapher_forward.1} parent=11 // pred_check
        %p121 = pneg %p77
      $region18: #{grapher_forward.1} parent=11 // pred_check_branch
        %123 = sbr.rel (%p121) target = $region20
      $region19: #{grapher_forward.1} parent=11 // pred_region
        _
      $region20: #{grapher_forward.1} parent=11 // pred_fallthru
        _
    $region12: #{grapher_forward.1} parent=5 // pred_fallthru
      _
    %p124 = scmp.lt.s32.totalorder %s9, 2
    // Predicated region
    $region21: #{grapher_forward.1} parent=5 // pred_check
      %p125 = pneg %p124
    $region22: #{grapher_forward.1} parent=5 // pred_check_branch
      %127 = sbr.rel (%p125) target = $region24
    $region23: #{grapher_forward.1} parent=5 // pred_region
      // Predicated region
      $region25: #{grapher_forward.1} parent=23 // pred_check
        %p128 = pneg %p29
      $region26: #{grapher_forward.1} parent=23 // pred_check_branch
        %130 = sbr.rel (%p128) target = $region28
      $region27: #{grapher_forward.1} parent=23 // pred_region
        %p131 = scmp.lt.s32.totalorder %s9, 1
        %s132 = scalar_select %p131, %s9, 1
        %s133 = smul.addr %s132, 8
        %s134 = smul.addr %s133, 8
        %s135 = scalar_lea.vmem %s0, %s134
      $region28: #{grapher_forward.1} parent=23 // pred_fallthru
        _
    $region24: #{grapher_forward.1} parent=5 // pred_fallthru
      _
    %p136 = scmp.le.s32.totalorder 1, %s9
    %p137 = scmp.lt.s32.totalorder %s9, 3
    %p138 = pnand %p136, %p137
    %p139 = pneg %p138
    // Predicated region
    $region29: #{grapher_forward.1} parent=5 // pred_check
      _
    $region30: #{grapher_forward.1} parent=5 // pred_check_branch
      %141 = sbr.rel (%p138) target = $region32
    $region31: #{grapher_forward.1} parent=5 // pred_region
      %s142 = ssub.s32 %s9, 1
      %p143 = scmp.lt.s32.totalorder %s14, 1
      %s144 = scalar_select %p143, %s14, 1
      %s145 = smul.addr %s144, 8
      %s146 = smul.addr %s145, 8
      %s147 = scalar_lea.vmem %s0, %s146
      %p148 = pneg %p35
      %p149 = pneg %p32
      %p150 = pneg %p56
      %p151 = pneg %p53
      %p152 = pneg %p77
      %p153 = pneg %p74
      %p154 = pneg %p103
      %p155 = pneg %p100
      %p156 = scmp.lt.s32.totalorder %s14, 1
      %s157 = scalar_select %p156, %s14, 1
      %s158 = smul.addr %s157, 8
      %s159 = smul.addr %s158, 8
      %s160 = scalar_lea.vmem %s3, %s159
      %p161 = scmp.lt.s32.totalorder %s14, 1
      %s162 = scalar_select %p161, %s14, 1
      %s163 = smul.addr %s162, 8
      %s164 = smul.addr %s163, 8
      %s165 = scalar_lea.vmem %s0, %s164
      %p166 = scmp.lt.s32.totalorder %s14, 1
      %s167 = scalar_select %p166, %s14, 1
      %s168 = smul.addr %s167, 8
      %s169 = smul.addr %s168, 8
      %s170 = scalar_lea.vmem %s3, %s169
      %v171 = vld [vmem:[%s1] sm:$0xff]
      %v172 = vld [vmem:[%s1 + $0x8] sm:$0xff]
      %v173 = vld [vmem:[%s2] sm:$0xff]
      %v174 = vld [vmem:[%s2 + $0x8] sm:$0xff]
      %v175 = vld [vmem:[%s165] sm:$0xff]
      %v176 = vld [vmem:[%s165 + $0x8] sm:$0xff]
      %v177 = vld [vmem:[%s165 + $0x10] sm:$0xff]
      %v178 = vld [vmem:[%s165 + $0x18] sm:$0xff]
      %v179 = vld [vmem:[%s165 + $0x20] sm:$0xff]
      %v180 = vld [vmem:[%s165 + $0x28] sm:$0xff]
      %v181 = vld [vmem:[%s165 + $0x30] sm:$0xff]
      %v182 = vld [vmem:[%s165 + $0x38] sm:$0xff]
      %184 = vset.pattern.permute.xlu0 0
      %185 = vperm.xlu0 %184, %v173
      %v186 = vpop.permute.xlu0 %185
      %189 = vset.pattern.permute.xlu0 0
      %190 = vperm.xlu0 %189, %v174
      %v191 = vpop.permute.xlu0 %190
      %vm193 = vcmask 130048
      %v195 = vsel %vm193, %v171, 0
      %v198 = vsel %vm193, %v172, 0
      %200 = vmatpush.msra.mxu0 0.0
      %201 = vmatpush.msra.mxu0 0.0
      %202 = vmatpush.msra.mxu0 0.0
      %203 = vmatpush.msra.mxu0 0.0
      %204 = vmatpush.msra.mxu0 0.0
      %205 = vmatpush.msra.mxu0 0.0
      %206 = vmatpush.msra.mxu0 0.0
      %207 = vmatpush.msra.mxu0 0.0
      %208 = vmatpush.msra.mxu0 0.0
      %209 = vmatpush.msra.mxu0 0.0
      %210 = vmatpush.msra.mxu0 0.0
      %211 = vmatpush.msra.mxu0 0.0
      %212 = vmatpush.msra.mxu0 0.0
      %213 = vmatpush.msra.mxu0 0.0
      %214 = vmatpush.msra.mxu0 %v179
      %215 = vmatpush.msra.mxu0 %v175
      %216 = vmatmul.f32.gmra.mxu0 %v195
      %v217 = vpop.f32.mrf.mxu0
      %v218 = vadd.f32 %v186, %v217
      %219 = vmatmul.f32.gmra.mxu0 %v198
      %v220 = vpop.f32.mrf.mxu0
      %v221 = vadd.f32 %v191, %v220
      %222 = vdwg.mxu0
      %223 = vmatpush.msra.mxu0 0.0
      %224 = vmatpush.msra.mxu0 0.0
      %225 = vmatpush.msra.mxu0 0.0
      %226 = vmatpush.msra.mxu0 0.0
      %227 = vmatpush.msra.mxu0 0.0
      %228 = vmatpush.msra.mxu0 0.0
      %229 = vmatpush.msra.mxu0 0.0
      %230 = vmatpush.msra.mxu0 0.0
      %231 = vmatpush.msra.mxu0 0.0
      %232 = vmatpush.msra.mxu0 0.0
      %233 = vmatpush.msra.mxu0 0.0
      %234 = vmatpush.msra.mxu0 0.0
      %235 = vmatpush.msra.mxu0 0.0
      %236 = vmatpush.msra.mxu0 0.0
      %237 = vmatpush.msra.mxu0 %v180
      %238 = vmatpush.msra.mxu0 %v176
      %239 = vmatmul.f32.gmra.mxu0 %v195
      %v240 = vpop.f32.mrf.mxu0
      %v241 = vadd.f32 %v186, %v240
      %242 = vmatmul.f32.gmra.mxu0 %v198
      %v243 = vpop.f32.mrf.mxu0
      %v244 = vadd.f32 %v191, %v243
      %245 = vdwg.mxu0
      %246 = vmatpush.msra.mxu0 0.0
      %247 = vmatpush.msra.mxu0 0.0
      %248 = vmatpush.msra.mxu0 0.0
      %249 = vmatpush.msra.mxu0 0.0
      %250 = vmatpush.msra.mxu0 0.0
      %251 = vmatpush.msra.mxu0 0.0
      %252 = vmatpush.msra.mxu0 0.0
      %253 = vmatpush.msra.mxu0 0.0
      %254 = vmatpush.msra.mxu0 0.0
      %255 = vmatpush.msra.mxu0 0.0
      %256 = vmatpush.msra.mxu0 0.0
      %257 = vmatpush.msra.mxu0 0.0
      %258 = vmatpush.msra.mxu0 0.0
      %259 = vmatpush.msra.mxu0 0.0
      %260 = vmatpush.msra.mxu0 %v181
      %261 = vmatpush.msra.mxu0 %v177
      %262 = vmatmul.f32.gmra.mxu0 %v195
      %v263 = vpop.f32.mrf.mxu0
      %v264 = vadd.f32 %v186, %v263
      %265 = vmatmul.f32.gmra.mxu0 %v198
      %v266 = vpop.f32.mrf.mxu0
      %v267 = vadd.f32 %v191, %v266
      %268 = vdwg.mxu0
      %269 = vmatpush.msra.mxu0 0.0
      %270 = vmatpush.msra.mxu0 0.0
      %271 = vmatpush.msra.mxu0 0.0
      %272 = vmatpush.msra.mxu0 0.0
      %273 = vmatpush.msra.mxu0 0.0
      %274 = vmatpush.msra.mxu0 0.0
      %275 = vmatpush.msra.mxu0 0.0
      %276 = vmatpush.msra.mxu0 0.0
      %277 = vmatpush.msra.mxu0 0.0
      %278 = vmatpush.msra.mxu0 0.0
      %279 = vmatpush.msra.mxu0 0.0
      %280 = vmatpush.msra.mxu0 0.0
      %281 = vmatpush.msra.mxu0 0.0
      %282 = vmatpush.msra.mxu0 0.0
      %283 = vmatpush.msra.mxu0 %v182
      %284 = vmatpush.msra.mxu0 %v178
      %285 = vmatmul.f32.gmra.mxu0 %v195
      %v286 = vpop.f32.mrf.mxu0
      %v287 = vadd.f32 %v186, %v286
      %288 = vmatmul.f32.gmra.mxu0 %v198
      %v289 = vpop.f32.mrf.mxu0
      %v290 = vadd.f32 %v191, %v289
      %291 = vdwg.mxu0
      %v292 = vlaneseq
      %v293 = vand.u32 %v292, 127
      %v294 = vadd.s32 %v293, 128
      %v295 = vadd.s32 %v293, 256
      %v296 = vadd.s32 %v293, 384
      %v297 = vsub.f32 %v218, %v287
      %v298 = vsub.f32 %v241, %v218
      %v299 = vsub.f32 %v264, %v241
      %v300 = vsub.f32 %v287, %v264
      %v301 = vsub.f32 %v221, %v290
      %v302 = vsub.f32 %v244, %v221
      %v303 = vsub.f32 %v267, %v244
      %v304 = vsub.f32 %v290, %v267
      %v305 = vmax.f32 %v297, 0.0
      %v306 = vmax.f32 %v298, 0.0
      %v307 = vmax.f32 %v299, 0.0
      %v308 = vmax.f32 %v300, 0.0
      %v309 = vmax.f32 %v301, 0.0
      %v310 = vmax.f32 %v302, 0.0
      %v311 = vmax.f32 %v303, 0.0
      %v312 = vmax.f32 %v304, 0.0
      %v313 = vsub.f32 %v218, %v264
      %v314 = vsub.f32 %v241, %v287
      %v315 = vsub.f32 %v264, %v218
      %v316 = vsub.f32 %v287, %v241
      %v317 = vsub.f32 %v221, %v267
      %v318 = vsub.f32 %v244, %v290
      %v319 = vsub.f32 %v267, %v221
      %v320 = vsub.f32 %v290, %v244
      %v321 = vmax.f32 %v305, %v313
      %v322 = vmax.f32 %v306, %v314
      %v323 = vmax.f32 %v307, %v315
      %v324 = vmax.f32 %v308, %v316
      %v325 = vmax.f32 %v309, %v317
      %v326 = vmax.f32 %v310, %v318
      %v327 = vmax.f32 %v311, %v319
      %v328 = vmax.f32 %v312, %v320
      %v329 = vsub.f32 %v218, %v241
      %v330 = vsub.f32 %v241, %v264
      %v331 = vsub.f32 %v264, %v287
      %v332 = vsub.f32 %v287, %v218
      %v333 = vsub.f32 %v221, %v244
      %v334 = vsub.f32 %v244, %v267
      %v335 = vsub.f32 %v267, %v290
      %v336 = vsub.f32 %v290, %v221
      %v337 = vmax.f32 %v321, %v329
      %v338 = vmax.f32 %v322, %v330
      %v339 = vmax.f32 %v323, %v331
      %v340 = vmax.f32 %v324, %v332
      %v341 = vmax.f32 %v325, %v333
      %v342 = vmax.f32 %v326, %v334
      %v343 = vmax.f32 %v327, %v335
      %v344 = vmax.f32 %v328, %v336
      %v345 = vand.u32 %v293, 63
      %v346 = vand.u32 %v294, 63
      %v347 = vand.u32 %v295, 63
      %v348 = vand.u32 %v296, 63
      %349 = vrot.lane.b32.xlu0 %v218, 16
      %v350 = vpop.permute.xlu0 %349
      %351 = vrot.lane.b32.xlu0 %v221, 16
      %v352 = vpop.permute.xlu0 %351
      %353 = vrot.lane.b32.xlu0 %v241, 16
      %v354 = vpop.permute.xlu0 %353
      %355 = vrot.lane.b32.xlu0 %v244, 16
      %v356 = vpop.permute.xlu0 %355
      %357 = vrot.lane.b32.xlu0 %v264, 16
      %v358 = vpop.permute.xlu0 %357
      %359 = vrot.lane.b32.xlu0 %v267, 16
      %v360 = vpop.permute.xlu0 %359
      %361 = vrot.lane.b32.xlu0 %v287, 16
      %v362 = vpop.permute.xlu0 %361
      %363 = vrot.lane.b32.xlu0 %v290, 16
      %v364 = vpop.permute.xlu0 %363
      %vm365 = vcmp.lt.s32.totalorder %v293, 16
      %v366 = vsel %vm365, %v358, %v362
      %v367 = vsel %vm365, %v360, %v364
      %v368 = vsel %vm365, %v354, %v358
      %v369 = vsel %vm365, %v356, %v360
      %v370 = vsel %vm365, %v350, %v354
      %v371 = vsel %vm365, %v352, %v356
      %v372 = vsel %vm365, %v362, %v350
      %v373 = vsel %vm365, %v364, %v352
      %374 = vrot.lane.b32.xlu0 %v218, 80
      %v375 = vpop.permute.xlu0 %374
      %376 = vrot.lane.b32.xlu0 %v221, 80
      %v377 = vpop.permute.xlu0 %376
      %378 = vrot.lane.b32.xlu0 %v241, 80
      %v379 = vpop.permute.xlu0 %378
      %380 = vrot.lane.b32.xlu0 %v244, 80
      %v381 = vpop.permute.xlu0 %380
      %382 = vrot.lane.b32.xlu0 %v264, 80
      %v383 = vpop.permute.xlu0 %382
      %384 = vrot.lane.b32.xlu0 %v267, 80
      %v385 = vpop.permute.xlu0 %384
      %386 = vrot.lane.b32.xlu0 %v287, 80
      %v387 = vpop.permute.xlu0 %386
      %388 = vrot.lane.b32.xlu0 %v290, 80
      %v389 = vpop.permute.xlu0 %388
      %vm390 = vcmp.lt.s32.totalorder %v293, 80
      %v391 = vsel %vm390, %v383, %v387
      %v392 = vsel %vm390, %v385, %v389
      %v393 = vsel %vm390, %v379, %v383
      %v394 = vsel %vm390, %v381, %v385
      %v395 = vsel %vm390, %v375, %v379
      %v396 = vsel %vm390, %v377, %v381
      %v397 = vsel %vm390, %v387, %v375
      %v398 = vsel %vm390, %v389, %v377
      %vm399 = vcmp.ge.s32.totalorder %v345, 16
      %vm400 = vcmp.ge.s32.totalorder %v346, 16
      %vm401 = vcmp.ge.s32.totalorder %v347, 16
      %vm402 = vcmp.ge.s32.totalorder %v348, 16
      %v403 = vsel %vm399, %v372, %v395
      %v404 = vsel %vm400, %v370, %v393
      %v405 = vsel %vm401, %v368, %v391
      %v406 = vsel %vm402, %v366, %v397
      %v407 = vsel %vm399, %v373, %v396
      %v408 = vsel %vm400, %v371, %v394
      %v409 = vsel %vm401, %v369, %v392
      %v410 = vsel %vm402, %v367, %v398
      %v411 = vsub.f32 %v218, %v403
      %v412 = vsub.f32 %v241, %v404
      %v413 = vsub.f32 %v264, %v405
      %v414 = vsub.f32 %v287, %v406
      %v415 = vsub.f32 %v221, %v407
      %v416 = vsub.f32 %v244, %v408
      %v417 = vsub.f32 %v267, %v409
      %v418 = vsub.f32 %v290, %v410
      %v419 = vmax.f32 %v337, %v411
      %v420 = vmax.f32 %v338, %v412
      %v421 = vmax.f32 %v339, %v413
      %v422 = vmax.f32 %v340, %v414
      %v423 = vmax.f32 %v341, %v415
      %v424 = vmax.f32 %v342, %v416
      %v425 = vmax.f32 %v343, %v417
      %v426 = vmax.f32 %v344, %v418
      %427 = vrot.lane.b32.xlu0 %v218, 32
      %v428 = vpop.permute.xlu0 %427
      %429 = vrot.lane.b32.xlu0 %v221, 32
      %v430 = vpop.permute.xlu0 %429
      %431 = vrot.lane.b32.xlu0 %v241, 32
      %v432 = vpop.permute.xlu0 %431
      %433 = vrot.lane.b32.xlu0 %v244, 32
      %v434 = vpop.permute.xlu0 %433
      %435 = vrot.lane.b32.xlu0 %v264, 32
      %v436 = vpop.permute.xlu0 %435
      %437 = vrot.lane.b32.xlu0 %v267, 32
      %v438 = vpop.permute.xlu0 %437
      %439 = vrot.lane.b32.xlu0 %v287, 32
      %v440 = vpop.permute.xlu0 %439
      %441 = vrot.lane.b32.xlu0 %v290, 32
      %v442 = vpop.permute.xlu0 %441
      %vm443 = vcmp.lt.s32.totalorder %v293, 32
      %v444 = vsel %vm443, %v436, %v440
      %v445 = vsel %vm443, %v438, %v442
      %v446 = vsel %vm443, %v432, %v436
      %v447 = vsel %vm443, %v434, %v438
      %v448 = vsel %vm443, %v428, %v432
      %v449 = vsel %vm443, %v430, %v434
      %v450 = vsel %vm443, %v440, %v428
      %v451 = vsel %vm443, %v442, %v430
      %452 = vrot.lane.b32.xlu0 %v218, 96
      %v453 = vpop.permute.xlu0 %452
      %454 = vrot.lane.b32.xlu0 %v221, 96
      %v455 = vpop.permute.xlu0 %454
      %456 = vrot.lane.b32.xlu0 %v241, 96
      %v457 = vpop.permute.xlu0 %456
      %458 = vrot.lane.b32.xlu0 %v244, 96
      %v459 = vpop.permute.xlu0 %458
      %460 = vrot.lane.b32.xlu0 %v264, 96
      %v461 = vpop.permute.xlu0 %460
      %462 = vrot.lane.b32.xlu0 %v267, 96
      %v463 = vpop.permute.xlu0 %462
      %464 = vrot.lane.b32.xlu0 %v287, 96
      %v465 = vpop.permute.xlu0 %464
      %466 = vrot.lane.b32.xlu0 %v290, 96
      %v467 = vpop.permute.xlu0 %466
      %vm468 = vcmp.lt.s32.totalorder %v293, 96
      %v469 = vsel %vm468, %v461, %v465
      %v470 = vsel %vm468, %v463, %v467
      %v471 = vsel %vm468, %v457, %v461
      %v472 = vsel %vm468, %v459, %v463
      %v473 = vsel %vm468, %v453, %v457
      %v474 = vsel %vm468, %v455, %v459
      %v475 = vsel %vm468, %v465, %v453
      %v476 = vsel %vm468, %v467, %v455
      %vm477 = vcmp.ge.s32.totalorder %v345, 32
      %vm478 = vcmp.ge.s32.totalorder %v346, 32
      %vm479 = vcmp.ge.s32.totalorder %v347, 32
      %vm480 = vcmp.ge.s32.totalorder %v348, 32
      %v481 = vsel %vm477, %v450, %v473
      %v482 = vsel %vm478, %v448, %v471
      %v483 = vsel %vm479, %v446, %v469
      %v484 = vsel %vm480, %v444, %v475
      %v485 = vsel %vm477, %v451, %v474
      %v486 = vsel %vm478, %v449, %v472
      %v487 = vsel %vm479, %v447, %v470
      %v488 = vsel %vm480, %v445, %v476
      %v489 = vsub.f32 %v218, %v481
      %v490 = vsub.f32 %v241, %v482
      %v491 = vsub.f32 %v264, %v483
      %v492 = vsub.f32 %v287, %v484
      %v493 = vsub.f32 %v221, %v485
      %v494 = vsub.f32 %v244, %v486
      %v495 = vsub.f32 %v267, %v487
      %v496 = vsub.f32 %v290, %v488
      %v497 = vmax.f32 %v419, %v489
      %v498 = vmax.f32 %v420, %v490
      %v499 = vmax.f32 %v421, %v491
      %v500 = vmax.f32 %v422, %v492
      %v501 = vmax.f32 %v423, %v493
      %v502 = vmax.f32 %v424, %v494
      %v503 = vmax.f32 %v425, %v495
      %v504 = vmax.f32 %v426, %v496
      %505 = vrot.lane.b32.xlu0 %v218, 48
      %v506 = vpop.permute.xlu0 %505
      %507 = vrot.lane.b32.xlu0 %v221, 48
      %v508 = vpop.permute.xlu0 %507
      %509 = vrot.lane.b32.xlu0 %v241, 48
      %v510 = vpop.permute.xlu0 %509
      %511 = vrot.lane.b32.xlu0 %v244, 48
      %v512 = vpop.permute.xlu0 %511
      %513 = vrot.lane.b32.xlu0 %v264, 48
      %v514 = vpop.permute.xlu0 %513
      %515 = vrot.lane.b32.xlu0 %v267, 48
      %v516 = vpop.permute.xlu0 %515
      %517 = vrot.lane.b32.xlu0 %v287, 48
      %v518 = vpop.permute.xlu0 %517
      %519 = vrot.lane.b32.xlu0 %v290, 48
      %v520 = vpop.permute.xlu0 %519
      %vm521 = vcmp.lt.s32.totalorder %v293, 48
      %v522 = vsel %vm521, %v514, %v518
      %v523 = vsel %vm521, %v516, %v520
      %v524 = vsel %vm521, %v510, %v514
      %v525 = vsel %vm521, %v512, %v516
      %v526 = vsel %vm521, %v506, %v510
      %v527 = vsel %vm521, %v508, %v512
      %v528 = vsel %vm521, %v518, %v506
      %v529 = vsel %vm521, %v520, %v508
      %530 = vrot.lane.b32.xlu0 %v218, 112
      %v531 = vpop.permute.xlu0 %530
      %532 = vrot.lane.b32.xlu0 %v221, 112
      %v533 = vpop.permute.xlu0 %532
      %534 = vrot.lane.b32.xlu0 %v241, 112
      %v535 = vpop.permute.xlu0 %534
      %536 = vrot.lane.b32.xlu0 %v244, 112
      %v537 = vpop.permute.xlu0 %536
      %538 = vrot.lane.b32.xlu0 %v264, 112
      %v539 = vpop.permute.xlu0 %538
      %540 = vrot.lane.b32.xlu0 %v267, 112
      %v541 = vpop.permute.xlu0 %540
      %542 = vrot.lane.b32.xlu0 %v287, 112
      %v543 = vpop.permute.xlu0 %542
      %544 = vrot.lane.b32.xlu0 %v290, 112
      %v545 = vpop.permute.xlu0 %544
      %vm546 = vcmp.lt.s32.totalorder %v293, 112
      %v547 = vsel %vm546, %v539, %v543
      %v548 = vsel %vm546, %v541, %v545
      %v549 = vsel %vm546, %v535, %v539
      %v550 = vsel %vm546, %v537, %v541
      %v551 = vsel %vm546, %v531, %v535
      %v552 = vsel %vm546, %v533, %v537
      %v553 = vsel %vm546, %v543, %v531
      %v554 = vsel %vm546, %v545, %v533
      %vm555 = vcmp.ge.s32.totalorder %v345, 48
      %vm556 = vcmp.ge.s32.totalorder %v346, 48
      %vm557 = vcmp.ge.s32.totalorder %v347, 48
      %vm558 = vcmp.ge.s32.totalorder %v348, 48
      %v559 = vsel %vm555, %v528, %v551
      %v560 = vsel %vm556, %v526, %v549
      %v561 = vsel %vm557, %v524, %v547
      %v562 = vsel %vm558, %v522, %v553
      %v563 = vsel %vm555, %v529, %v552
      %v564 = vsel %vm556, %v527, %v550
      %v565 = vsel %vm557, %v525, %v548
      %v566 = vsel %vm558, %v523, %v554
      %v567 = vsub.f32 %v218, %v559
      %v568 = vsub.f32 %v241, %v560
      %v569 = vsub.f32 %v264, %v561
      %v570 = vsub.f32 %v287, %v562
      %v571 = vsub.f32 %v221, %v563
      %v572 = vsub.f32 %v244, %v564
      %v573 = vsub.f32 %v267, %v565
      %v574 = vsub.f32 %v290, %v566
      %v575 = vmax.f32 %v497, %v567
      %v576 = vmax.f32 %v498, %v568
      %v577 = vmax.f32 %v499, %v569
      %v578 = vmax.f32 %v500, %v570
      %v579 = vmax.f32 %v501, %v571
      %v580 = vmax.f32 %v502, %v572
      %v581 = vmax.f32 %v503, %v573
      %v582 = vmax.f32 %v504, %v574
      %v583 = vand.u32 %v293, 7
      %v584 = vand.u32 %v294, 7
      %v585 = vand.u32 %v295, 7
      %v586 = vand.u32 %v296, 7
      %587 = vrot.lane.b32.xlu0 %v218, 2
      %v588 = vpop.permute.xlu0 %587
      %589 = vrot.lane.b32.xlu0 %v221, 2
      %v590 = vpop.permute.xlu0 %589
      %591 = vrot.lane.b32.xlu0 %v241, 2
      %v592 = vpop.permute.xlu0 %591
      %593 = vrot.lane.b32.xlu0 %v244, 2
      %v594 = vpop.permute.xlu0 %593
      %595 = vrot.lane.b32.xlu0 %v264, 2
      %v596 = vpop.permute.xlu0 %595
      %597 = vrot.lane.b32.xlu0 %v267, 2
      %v598 = vpop.permute.xlu0 %597
      %599 = vrot.lane.b32.xlu0 %v287, 2
      %v600 = vpop.permute.xlu0 %599
      %601 = vrot.lane.b32.xlu0 %v290, 2
      %v602 = vpop.permute.xlu0 %601
      %vm603 = vcmp.lt.s32.totalorder %v293, 2
      %v604 = vsel %vm603, %v596, %v600
      %v605 = vsel %vm603, %v598, %v602
      %v606 = vsel %vm603, %v592, %v596
      %v607 = vsel %vm603, %v594, %v598
      %v608 = vsel %vm603, %v588, %v592
      %v609 = vsel %vm603, %v590, %v594
      %v610 = vsel %vm603, %v600, %v588
      %v611 = vsel %vm603, %v602, %v590
      %612 = vrot.lane.b32.xlu0 %v218, 122
      %v613 = vpop.permute.xlu0 %612
      %614 = vrot.lane.b32.xlu0 %v221, 122
      %v615 = vpop.permute.xlu0 %614
      %616 = vrot.lane.b32.xlu0 %v241, 122
      %v617 = vpop.permute.xlu0 %616
      %618 = vrot.lane.b32.xlu0 %v244, 122
      %v619 = vpop.permute.xlu0 %618
      %620 = vrot.lane.b32.xlu0 %v264, 122
      %v621 = vpop.permute.xlu0 %620
      %622 = vrot.lane.b32.xlu0 %v267, 122
      %v623 = vpop.permute.xlu0 %622
      %624 = vrot.lane.b32.xlu0 %v287, 122
      %v625 = vpop.permute.xlu0 %624
      %626 = vrot.lane.b32.xlu0 %v290, 122
      %v627 = vpop.permute.xlu0 %626
      %vm628 = vcmp.lt.s32.totalorder %v293, 122
      %v629 = vsel %vm628, %v621, %v625
      %v630 = vsel %vm628, %v623, %v627
      %v631 = vsel %vm628, %v617, %v621
      %v632 = vsel %vm628, %v619, %v623
      %v633 = vsel %vm628, %v613, %v617
      %v634 = vsel %vm628, %v615, %v619
      %v635 = vsel %vm628, %v625, %v613
      %v636 = vsel %vm628, %v627, %v615
      %vm637 = vcmp.ge.s32.totalorder %v583, 2
      %vm638 = vcmp.ge.s32.totalorder %v584, 2
      %vm639 = vcmp.ge.s32.totalorder %v585, 2
      %vm640 = vcmp.ge.s32.totalorder %v586, 2
      %v641 = vsel %vm637, %v610, %v633
      %v642 = vsel %vm638, %v608, %v631
      %v643 = vsel %vm639, %v606, %v629
      %v644 = vsel %vm640, %v604, %v635
      %v645 = vsel %vm637, %v611, %v634
      %v646 = vsel %vm638, %v609, %v632
      %v647 = vsel %vm639, %v607, %v630
      %v648 = vsel %vm640, %v605, %v636
      %v649 = vsub.f32 %v218, %v641
      %v650 = vsub.f32 %v241, %v642
      %v651 = vsub.f32 %v264, %v643
      %v652 = vsub.f32 %v287, %v644
      %v653 = vsub.f32 %v221, %v645
      %v654 = vsub.f32 %v244, %v646
      %v655 = vsub.f32 %v267, %v647
      %v656 = vsub.f32 %v290, %v648
      %v657 = vmax.f32 %v575, %v649
      %v658 = vmax.f32 %v576, %v650
      %v659 = vmax.f32 %v577, %v651
      %v660 = vmax.f32 %v578, %v652
      %v661 = vmax.f32 %v579, %v653
      %v662 = vmax.f32 %v580, %v654
      %v663 = vmax.f32 %v581, %v655
      %v664 = vmax.f32 %v582, %v656
      %665 = vrot.lane.b32.xlu0 %v218, 4
      %v666 = vpop.permute.xlu0 %665
      %667 = vrot.lane.b32.xlu0 %v221, 4
      %v668 = vpop.permute.xlu0 %667
      %669 = vrot.lane.b32.xlu0 %v241, 4
      %v670 = vpop.permute.xlu0 %669
      %671 = vrot.lane.b32.xlu0 %v244, 4
      %v672 = vpop.permute.xlu0 %671
      %673 = vrot.lane.b32.xlu0 %v264, 4
      %v674 = vpop.permute.xlu0 %673
      %675 = vrot.lane.b32.xlu0 %v267, 4
      %v676 = vpop.permute.xlu0 %675
      %677 = vrot.lane.b32.xlu0 %v287, 4
      %v678 = vpop.permute.xlu0 %677
      %679 = vrot.lane.b32.xlu0 %v290, 4
      %v680 = vpop.permute.xlu0 %679
      %vm681 = vcmp.lt.s32.totalorder %v293, 4
      %v682 = vsel %vm681, %v674, %v678
      %v683 = vsel %vm681, %v676, %v680
      %v684 = vsel %vm681, %v670, %v674
      %v685 = vsel %vm681, %v672, %v676
      %v686 = vsel %vm681, %v666, %v670
      %v687 = vsel %vm681, %v668, %v672
      %v688 = vsel %vm681, %v678, %v666
      %v689 = vsel %vm681, %v680, %v668
      %690 = vrot.lane.b32.xlu0 %v218, 124
      %v691 = vpop.permute.xlu0 %690
      %692 = vrot.lane.b32.xlu0 %v221, 124
      %v693 = vpop.permute.xlu0 %692
      %694 = vrot.lane.b32.xlu0 %v241, 124
      %v695 = vpop.permute.xlu0 %694
      %696 = vrot.lane.b32.xlu0 %v244, 124
      %v697 = vpop.permute.xlu0 %696
      %698 = vrot.lane.b32.xlu0 %v264, 124
      %v699 = vpop.permute.xlu0 %698
      %700 = vrot.lane.b32.xlu0 %v267, 124
      %v701 = vpop.permute.xlu0 %700
      %702 = vrot.lane.b32.xlu0 %v287, 124
      %v703 = vpop.permute.xlu0 %702
      %704 = vrot.lane.b32.xlu0 %v290, 124
      %v705 = vpop.permute.xlu0 %704
      %vm706 = vcmp.lt.s32.totalorder %v293, 124
      %v707 = vsel %vm706, %v699, %v703
      %v708 = vsel %vm706, %v701, %v705
      %v709 = vsel %vm706, %v695, %v699
      %v710 = vsel %vm706, %v697, %v701
      %v711 = vsel %vm706, %v691, %v695
      %v712 = vsel %vm706, %v693, %v697
      %v713 = vsel %vm706, %v703, %v691
      %v714 = vsel %vm706, %v705, %v693
      %vm715 = vcmp.ge.s32.totalorder %v583, 4
      %vm716 = vcmp.ge.s32.totalorder %v584, 4
      %vm717 = vcmp.ge.s32.totalorder %v585, 4
      %vm718 = vcmp.ge.s32.totalorder %v586, 4
      %v719 = vsel %vm715, %v688, %v711
      %v720 = vsel %vm716, %v686, %v709
      %v721 = vsel %vm717, %v684, %v707
      %v722 = vsel %vm718, %v682, %v713
      %v723 = vsel %vm715, %v689, %v712
      %v724 = vsel %vm716, %v687, %v710
      %v725 = vsel %vm717, %v685, %v708
      %v726 = vsel %vm718, %v683, %v714
      %v727 = vsub.f32 %v218, %v719
      %v728 = vsub.f32 %v241, %v720
      %v729 = vsub.f32 %v264, %v721
      %v730 = vsub.f32 %v287, %v722
      %v731 = vsub.f32 %v221, %v723
      %v732 = vsub.f32 %v244, %v724
      %v733 = vsub.f32 %v267, %v725
      %v734 = vsub.f32 %v290, %v726
      %v735 = vmax.f32 %v657, %v727
      %v736 = vmax.f32 %v658, %v728
      %v737 = vmax.f32 %v659, %v729
      %v738 = vmax.f32 %v660, %v730
      %v739 = vmax.f32 %v661, %v731
      %v740 = vmax.f32 %v662, %v732
      %v741 = vmax.f32 %v663, %v733
      %v742 = vmax.f32 %v664, %v734
      %743 = vrot.lane.b32.xlu0 %v218, 6
      %v744 = vpop.permute.xlu0 %743
      %745 = vrot.lane.b32.xlu0 %v221, 6
      %v746 = vpop.permute.xlu0 %745
      %747 = vrot.lane.b32.xlu0 %v241, 6
      %v748 = vpop.permute.xlu0 %747
      %749 = vrot.lane.b32.xlu0 %v244, 6
      %v750 = vpop.permute.xlu0 %749
      %751 = vrot.lane.b32.xlu0 %v264, 6
      %v752 = vpop.permute.xlu0 %751
      %753 = vrot.lane.b32.xlu0 %v267, 6
      %v754 = vpop.permute.xlu0 %753
      %755 = vrot.lane.b32.xlu0 %v287, 6
      %v756 = vpop.permute.xlu0 %755
      %757 = vrot.lane.b32.xlu0 %v290, 6
      %v758 = vpop.permute.xlu0 %757
      %vm759 = vcmp.lt.s32.totalorder %v293, 6
      %v760 = vsel %vm759, %v752, %v756
      %v761 = vsel %vm759, %v754, %v758
      %v762 = vsel %vm759, %v748, %v752
      %v763 = vsel %vm759, %v750, %v754
      %v764 = vsel %vm759, %v744, %v748
      %v765 = vsel %vm759, %v746, %v750
      %v766 = vsel %vm759, %v756, %v744
      %v767 = vsel %vm759, %v758, %v746
      %768 = vrot.lane.b32.xlu0 %v218, 126
      %v769 = vpop.permute.xlu0 %768
      %770 = vrot.lane.b32.xlu0 %v221, 126
      %v771 = vpop.permute.xlu0 %770
      %772 = vrot.lane.b32.xlu0 %v241, 126
      %v773 = vpop.permute.xlu0 %772
      %774 = vrot.lane.b32.xlu0 %v244, 126
      %v775 = vpop.permute.xlu0 %774
      %776 = vrot.lane.b32.xlu0 %v264, 126
      %v777 = vpop.permute.xlu0 %776
      %778 = vrot.lane.b32.xlu0 %v267, 126
      %v779 = vpop.permute.xlu0 %778
      %780 = vrot.lane.b32.xlu0 %v287, 126
      %v781 = vpop.permute.xlu0 %780
      %782 = vrot.lane.b32.xlu0 %v290, 126
      %v783 = vpop.permute.xlu0 %782
      %vm784 = vcmp.lt.s32.totalorder %v293, 126
      %v785 = vsel %vm784, %v777, %v781
      %v786 = vsel %vm784, %v779, %v783
      %v787 = vsel %vm784, %v773, %v777
      %v788 = vsel %vm784, %v775, %v779
      %v789 = vsel %vm784, %v769, %v773
      %v790 = vsel %vm784, %v771, %v775
      %v791 = vsel %vm784, %v781, %v769
      %v792 = vsel %vm784, %v783, %v771
      %vm793 = vcmp.ge.s32.totalorder %v583, 6
      %vm794 = vcmp.ge.s32.totalorder %v584, 6
      %vm795 = vcmp.ge.s32.totalorder %v585, 6
      %vm796 = vcmp.ge.s32.totalorder %v586, 6
      %v797 = vsel %vm793, %v766, %v789
      %v798 = vsel %vm794, %v764, %v787
      %v799 = vsel %vm795, %v762, %v785
      %v800 = vsel %vm796, %v760, %v791
      %v801 = vsel %vm793, %v767, %v790
      %v802 = vsel %vm794, %v765, %v788
      %v803 = vsel %vm795, %v763, %v786
      %v804 = vsel %vm796, %v761, %v792
      %v805 = vsub.f32 %v218, %v797
      %v806 = vsub.f32 %v241, %v798
      %v807 = vsub.f32 %v264, %v799
      %v808 = vsub.f32 %v287, %v800
      %v809 = vsub.f32 %v221, %v801
      %v810 = vsub.f32 %v244, %v802
      %v811 = vsub.f32 %v267, %v803
      %v812 = vsub.f32 %v290, %v804
      %v813 = vmax.f32 %v735, %v805
      %v814 = vmax.f32 %v736, %v806
      %v815 = vmax.f32 %v737, %v807
      %v816 = vmax.f32 %v738, %v808
      %v817 = vmax.f32 %v739, %v809
      %v818 = vmax.f32 %v740, %v810
      %v819 = vmax.f32 %v741, %v811
      %v820 = vmax.f32 %v742, %v812
      %821 = vset.pattern.permute.xlu0 1
      %822 = vperm.xlu0 %821, %v173
      %v823 = vpop.permute.xlu0 %822
      %825 = vset.pattern.permute.xlu0 1
      %826 = vperm.xlu0 %825, %v174
      %v827 = vpop.permute.xlu0 %826
      %829 = vrot.lane.b32.xlu0 %v171, 112
      %v830 = vpop.permute.xlu0 %829
      %831 = vrot.lane.b32.xlu0 %v172, 112
      %v832 = vpop.permute.xlu0 %831
      %vm833 = vcmask 261120
      %v834 = vsel %vm833, %v830, 0
      %v836 = vsel %vm833, %v832, 0
      %838 = vmatpush.msra.mxu0 0.0
      %839 = vmatpush.msra.mxu0 0.0
      %840 = vmatpush.msra.mxu0 0.0
      %841 = vmatpush.msra.mxu0 0.0
      %842 = vmatpush.msra.mxu0 0.0
      %843 = vmatpush.msra.mxu0 0.0
      %844 = vmatpush.msra.mxu0 0.0
      %845 = vmatpush.msra.mxu0 0.0
      %846 = vmatpush.msra.mxu0 0.0
      %847 = vmatpush.msra.mxu0 0.0
      %848 = vmatpush.msra.mxu0 0.0
      %849 = vmatpush.msra.mxu0 0.0
      %850 = vmatpush.msra.mxu0 %v817
      %851 = vmatpush.msra.mxu0 %v813
      %852 = vmatpush.msra.mxu0 %v221
      %853 = vmatpush.msra.mxu0 %v218
      %854 = vmatmul.f32.gmra.mxu0 %v834
      %v855 = vpop.f32.mrf.mxu0
      %v856 = vadd.f32 %v823, %v855
      %857 = vmatmul.f32.gmra.mxu0 %v836
      %v858 = vpop.f32.mrf.mxu0
      %v859 = vadd.f32 %v827, %v858
      %860 = vdwg.mxu0
      %861 = vmatpush.msra.mxu0 0.0
      %862 = vmatpush.msra.mxu0 0.0
      %863 = vmatpush.msra.mxu0 0.0
      %864 = vmatpush.msra.mxu0 0.0
      %865 = vmatpush.msra.mxu0 0.0
      %866 = vmatpush.msra.mxu0 0.0
      %867 = vmatpush.msra.mxu0 0.0
      %868 = vmatpush.msra.mxu0 0.0
      %869 = vmatpush.msra.mxu0 0.0
      %870 = vmatpush.msra.mxu0 0.0
      %871 = vmatpush.msra.mxu0 0.0
      %872 = vmatpush.msra.mxu0 0.0
      %873 = vmatpush.msra.mxu0 %v818
      %874 = vmatpush.msra.mxu0 %v814
      %875 = vmatpush.msra.mxu0 %v244
      %876 = vmatpush.msra.mxu0 %v241
      %877 = vmatmul.f32.gmra.mxu0 %v834
      %v878 = vpop.f32.mrf.mxu0
      %v879 = vadd.f32 %v823, %v878
      %880 = vmatmul.f32.gmra.mxu0 %v836
      %v881 = vpop.f32.mrf.mxu0
      %v882 = vadd.f32 %v827, %v881
      %883 = vdwg.mxu0
      %884 = vmatpush.msra.mxu0 0.0
      %885 = vmatpush.msra.mxu0 0.0
      %886 = vmatpush.msra.mxu0 0.0
      %887 = vmatpush.msra.mxu0 0.0
      %888 = vmatpush.msra.mxu0 0.0
      %889 = vmatpush.msra.mxu0 0.0
      %890 = vmatpush.msra.mxu0 0.0
      %891 = vmatpush.msra.mxu0 0.0
      %892 = vmatpush.msra.mxu0 0.0
      %893 = vmatpush.msra.mxu0 0.0
      %894 = vmatpush.msra.mxu0 0.0
      %895 = vmatpush.msra.mxu0 0.0
      %896 = vmatpush.msra.mxu0 %v819
      %897 = vmatpush.msra.mxu0 %v815
      %898 = vmatpush.msra.mxu0 %v267
      %899 = vmatpush.msra.mxu0 %v264
      %900 = vmatmul.f32.gmra.mxu0 %v834
      %v901 = vpop.f32.mrf.mxu0
      %v902 = vadd.f32 %v823, %v901
      %903 = vmatmul.f32.gmra.mxu0 %v836
      %v904 = vpop.f32.mrf.mxu0
      %v905 = vadd.f32 %v827, %v904
      %906 = vdwg.mxu0
      %907 = vmatpush.msra.mxu0 0.0
      %908 = vmatpush.msra.mxu0 0.0
      %909 = vmatpush.msra.mxu0 0.0
      %910 = vmatpush.msra.mxu0 0.0
      %911 = vmatpush.msra.mxu0 0.0
      %912 = vmatpush.msra.mxu0 0.0
      %913 = vmatpush.msra.mxu0 0.0
      %914 = vmatpush.msra.mxu0 0.0
      %915 = vmatpush.msra.mxu0 0.0
      %916 = vmatpush.msra.mxu0 0.0
      %917 = vmatpush.msra.mxu0 0.0
      %918 = vmatpush.msra.mxu0 0.0
      %919 = vmatpush.msra.mxu0 %v820
      %920 = vmatpush.msra.mxu0 %v816
      %921 = vmatpush.msra.mxu0 %v290
      %922 = vmatpush.msra.mxu0 %v287
      %923 = vmatmul.f32.gmra.mxu0 %v834
      %v924 = vpop.f32.mrf.mxu0
      %v925 = vadd.f32 %v823, %v924
      %926 = vmatmul.f32.gmra.mxu0 %v836
      %v927 = vpop.f32.mrf.mxu0
      %v928 = vadd.f32 %v827, %v927
      %929 = vdwg.mxu0
      %v930 = vmul.f32 %v856, 0.5
      %v931 = vmul.f32 %v879, 0.5
      %v932 = vmul.f32 %v902, 0.5
      %v933 = vmul.f32 %v925, 0.5
      %v934 = vmul.f32 %v859, 0.5
      %v935 = vmul.f32 %v882, 0.5
      %v936 = vmul.f32 %v905, 0.5
      %v937 = vmul.f32 %v928, 0.5
      %v938 = vmul.f32 %v856, 0.70710677
      %v939 = vmul.f32 %v879, 0.70710677
      %v940 = vmul.f32 %v902, 0.70710677
      %v941 = vmul.f32 %v925, 0.70710677
      %v942 = vmul.f32 %v859, 0.70710677
      %v943 = vmul.f32 %v882, 0.70710677
      %v944 = vmul.f32 %v905, 0.70710677
      %v945 = vmul.f32 %v928, 0.70710677
      %v946 = vmul.f32 %v938, %v938
      %v947 = vmin.f32 16.0, %v946
      %v948 = vmul.f32 %v947, 2.1237322e-06
      %v949 = vadd.f32 %v948, 0.00028619796
      %v950 = vmul.f32 %v947, %v949
      %v951 = vadd.f32 %v950, 0.0036580483
      %v952 = vmul.f32 %v947, %v951
      %v953 = vadd.f32 %v952, 0.05243302
      %v954 = vmul.f32 %v947, %v953
      %v955 = vadd.f32 %v954, 0.18741608
      %v956 = vmul.f32 %v947, %v955
      %v957 = vadd.f32 %v956, 1.1283791
      %v958 = vmul.f32 %v938, %v957
      %v959 = vmul.f32 %v947, 3.8918573e-05
      %v960 = vadd.f32 %v959, 0.001143296
      %v961 = vmul.f32 %v947, %v960
      %v962 = vadd.f32 %v961, 0.014752088
      %v963 = vmul.f32 %v947, %v962
      %v964 = vadd.f32 %v963, 0.112945676
      %v965 = vmul.f32 %v947, %v964
      %v966 = vadd.f32 %v965, 0.4994258
      %v967 = vmul.f32 %v947, %v966
      %v968 = vadd.f32 %v967, 1.0
      %v969 = vrcp.pop %v968
      %v970 = vmul.f32 %v968, %v969
      %v971 = vsub.f32 1.0, %v970
      %v972 = vmul.f32 %v969, %v971
      %v973 = vadd.f32 %v969, %v972
      %vm974 = vweird.f32 %v968
      %vm975 = vweird.f32 %v969
      %vm976 = vmor %vm974, %vm975
      %v977 = vsel %vm976, %v969, %v973
      %v978 = vand.u32 2147483647, %v968
      %vm979 = vcmp.eq.f32.partialorder %v978, 8.507059e+37
      %v980 = vand.u32 %v968, 2147483648
      %v981 = vor.u32 1.1754944e-38, %v980
      %v982 = vsel %vm979, %v981, %v977
      %v983 = vmul.f32 %v958, %v982
      %v984 = vmin.f32 %v983, 1.0
      %v985 = vmax.f32 %v984, -1.0
      %v986 = vmul.f32 %v939, %v939
      %v987 = vmin.f32 16.0, %v986
      %v988 = vmul.f32 %v987, 2.1237322e-06
      %v989 = vadd.f32 %v988, 0.00028619796
      %v990 = vmul.f32 %v987, %v989
      %v991 = vadd.f32 %v990, 0.0036580483
      %v992 = vmul.f32 %v987, %v991
      %v993 = vadd.f32 %v992, 0.05243302
      %v994 = vmul.f32 %v987, %v993
      %v995 = vadd.f32 %v994, 0.18741608
      %v996 = vmul.f32 %v987, %v995
      %v997 = vadd.f32 %v996, 1.1283791
      %v998 = vmul.f32 %v939, %v997
      %v999 = vmul.f32 %v987, 3.8918573e-05
      %v1000 = vadd.f32 %v999, 0.001143296
      %v1001 = vmul.f32 %v987, %v1000
      %v1002 = vadd.f32 %v1001, 0.014752088
      %v1003 = vmul.f32 %v987, %v1002
      %v1004 = vadd.f32 %v1003, 0.112945676
      %v1005 = vmul.f32 %v987, %v1004
      %v1006 = vadd.f32 %v1005, 0.4994258
      %v1007 = vmul.f32 %v987, %v1006
      %v1008 = vadd.f32 %v1007, 1.0
      %v1009 = vrcp.pop %v1008
      %v1010 = vmul.f32 %v1008, %v1009
      %v1011 = vsub.f32 1.0, %v1010
      %v1012 = vmul.f32 %v1009, %v1011
      %v1013 = vadd.f32 %v1009, %v1012
      %vm1014 = vweird.f32 %v1008
      %vm1015 = vweird.f32 %v1009
      %vm1016 = vmor %vm1014, %vm1015
      %v1017 = vsel %vm1016, %v1009, %v1013
      %v1018 = vand.u32 2147483647, %v1008
      %vm1019 = vcmp.eq.f32.partialorder %v1018, 8.507059e+37
      %v1020 = vand.u32 %v1008, 2147483648
      %v1021 = vor.u32 1.1754944e-38, %v1020
      %v1022 = vsel %vm1019, %v1021, %v1017
      %v1023 = vmul.f32 %v998, %v1022
      %v1024 = vmin.f32 %v1023, 1.0
      %v1025 = vmax.f32 %v1024, -1.0
      %v1026 = vmul.f32 %v940, %v940
      %v1027 = vmin.f32 16.0, %v1026
      %v1028 = vmul.f32 %v1027, 2.1237322e-06
      %v1029 = vadd.f32 %v1028, 0.00028619796
      %v1030 = vmul.f32 %v1027, %v1029
      %v1031 = vadd.f32 %v1030, 0.0036580483
      %v1032 = vmul.f32 %v1027, %v1031
      %v1033 = vadd.f32 %v1032, 0.05243302
      %v1034 = vmul.f32 %v1027, %v1033
      %v1035 = vadd.f32 %v1034, 0.18741608
      %v1036 = vmul.f32 %v1027, %v1035
      %v1037 = vadd.f32 %v1036, 1.1283791
      %v1038 = vmul.f32 %v940, %v1037
      %v1039 = vmul.f32 %v1027, 3.8918573e-05
      %v1040 = vadd.f32 %v1039, 0.001143296
      %v1041 = vmul.f32 %v1027, %v1040
      %v1042 = vadd.f32 %v1041, 0.014752088
      %v1043 = vmul.f32 %v1027, %v1042
      %v1044 = vadd.f32 %v1043, 0.112945676
      %v1045 = vmul.f32 %v1027, %v1044
      %v1046 = vadd.f32 %v1045, 0.4994258
      %v1047 = vmul.f32 %v1027, %v1046
      %v1048 = vadd.f32 %v1047, 1.0
      %v1049 = vrcp.pop %v1048
      %v1050 = vmul.f32 %v1048, %v1049
      %v1051 = vsub.f32 1.0, %v1050
      %v1052 = vmul.f32 %v1049, %v1051
      %v1053 = vadd.f32 %v1049, %v1052
      %vm1054 = vweird.f32 %v1048
      %vm1055 = vweird.f32 %v1049
      %vm1056 = vmor %vm1054, %vm1055
      %v1057 = vsel %vm1056, %v1049, %v1053
      %v1058 = vand.u32 2147483647, %v1048
      %vm1059 = vcmp.eq.f32.partialorder %v1058, 8.507059e+37
      %v1060 = vand.u32 %v1048, 2147483648
      %v1061 = vor.u32 1.1754944e-38, %v1060
      %v1062 = vsel %vm1059, %v1061, %v1057
      %v1063 = vmul.f32 %v1038, %v1062
      %v1064 = vmin.f32 %v1063, 1.0
      %v1065 = vmax.f32 %v1064, -1.0
      %v1066 = vmul.f32 %v941, %v941
      %v1067 = vmin.f32 16.0, %v1066
      %v1068 = vmul.f32 %v1067, 2.1237322e-06
      %v1069 = vadd.f32 %v1068, 0.00028619796
      %v1070 = vmul.f32 %v1067, %v1069
      %v1071 = vadd.f32 %v1070, 0.0036580483
      %v1072 = vmul.f32 %v1067, %v1071
      %v1073 = vadd.f32 %v1072, 0.05243302
      %v1074 = vmul.f32 %v1067, %v1073
      %v1075 = vadd.f32 %v1074, 0.18741608
      %v1076 = vmul.f32 %v1067, %v1075
      %v1077 = vadd.f32 %v1076, 1.1283791
      %v1078 = vmul.f32 %v941, %v1077
      %v1079 = vmul.f32 %v1067, 3.8918573e-05
      %v1080 = vadd.f32 %v1079, 0.001143296
      %v1081 = vmul.f32 %v1067, %v1080
      %v1082 = vadd.f32 %v1081, 0.014752088
      %v1083 = vmul.f32 %v1067, %v1082
      %v1084 = vadd.f32 %v1083, 0.112945676
      %v1085 = vmul.f32 %v1067, %v1084
      %v1086 = vadd.f32 %v1085, 0.4994258
      %v1087 = vmul.f32 %v1067, %v1086
      %v1088 = vadd.f32 %v1087, 1.0
      %v1089 = vrcp.pop %v1088
      %v1090 = vmul.f32 %v1088, %v1089
      %v1091 = vsub.f32 1.0, %v1090
      %v1092 = vmul.f32 %v1089, %v1091
      %v1093 = vadd.f32 %v1089, %v1092
      %vm1094 = vweird.f32 %v1088
      %vm1095 = vweird.f32 %v1089
      %vm1096 = vmor %vm1094, %vm1095
      %v1097 = vsel %vm1096, %v1089, %v1093
      %v1098 = vand.u32 2147483647, %v1088
      %vm1099 = vcmp.eq.f32.partialorder %v1098, 8.507059e+37
      %v1100 = vand.u32 %v1088, 2147483648
      %v1101 = vor.u32 1.1754944e-38, %v1100
      %v1102 = vsel %vm1099, %v1101, %v1097
      %v1103 = vmul.f32 %v1078, %v1102
      %v1104 = vmin.f32 %v1103, 1.0
      %v1105 = vmax.f32 %v1104, -1.0
      %v1106 = vmul.f32 %v942, %v942
      %v1107 = vmin.f32 16.0, %v1106
      %v1108 = vmul.f32 %v1107, 2.1237322e-06
      %v1109 = vadd.f32 %v1108, 0.00028619796
      %v1110 = vmul.f32 %v1107, %v1109
      %v1111 = vadd.f32 %v1110, 0.0036580483
      %v1112 = vmul.f32 %v1107, %v1111
      %v1113 = vadd.f32 %v1112, 0.05243302
      %v1114 = vmul.f32 %v1107, %v1113
      %v1115 = vadd.f32 %v1114, 0.18741608
      %v1116 = vmul.f32 %v1107, %v1115
      %v1117 = vadd.f32 %v1116, 1.1283791
      %v1118 = vmul.f32 %v942, %v1117
      %v1119 = vmul.f32 %v1107, 3.8918573e-05
      %v1120 = vadd.f32 %v1119, 0.001143296
      %v1121 = vmul.f32 %v1107, %v1120
      %v1122 = vadd.f32 %v1121, 0.014752088
      %v1123 = vmul.f32 %v1107, %v1122
      %v1124 = vadd.f32 %v1123, 0.112945676
      %v1125 = vmul.f32 %v1107, %v1124
      %v1126 = vadd.f32 %v1125, 0.4994258
      %v1127 = vmul.f32 %v1107, %v1126
      %v1128 = vadd.f32 %v1127, 1.0
      %v1129 = vrcp.pop %v1128
      %v1130 = vmul.f32 %v1128, %v1129
      %v1131 = vsub.f32 1.0, %v1130
      %v1132 = vmul.f32 %v1129, %v1131
      %v1133 = vadd.f32 %v1129, %v1132
      %vm1134 = vweird.f32 %v1128
      %vm1135 = vweird.f32 %v1129
      %vm1136 = vmor %vm1134, %vm1135
      %v1137 = vsel %vm1136, %v1129, %v1133
      %v1138 = vand.u32 2147483647, %v1128
      %vm1139 = vcmp.eq.f32.partialorder %v1138, 8.507059e+37
      %v1140 = vand.u32 %v1128, 2147483648
      %v1141 = vor.u32 1.1754944e-38, %v1140
      %v1142 = vsel %vm1139, %v1141, %v1137
      %v1143 = vmul.f32 %v1118, %v1142
      %v1144 = vmin.f32 %v1143, 1.0
      %v1145 = vmax.f32 %v1144, -1.0
      %v1146 = vmul.f32 %v943, %v943
      %v1147 = vmin.f32 16.0, %v1146
      %v1148 = vmul.f32 %v1147, 2.1237322e-06
      %v1149 = vadd.f32 %v1148, 0.00028619796
      %v1150 = vmul.f32 %v1147, %v1149
      %v1151 = vadd.f32 %v1150, 0.0036580483
      %v1152 = vmul.f32 %v1147, %v1151
      %v1153 = vadd.f32 %v1152, 0.05243302
      %v1154 = vmul.f32 %v1147, %v1153
      %v1155 = vadd.f32 %v1154, 0.18741608
      %v1156 = vmul.f32 %v1147, %v1155
      %v1157 = vadd.f32 %v1156, 1.1283791
      %v1158 = vmul.f32 %v943, %v1157
      %v1159 = vmul.f32 %v1147, 3.8918573e-05
      %v1160 = vadd.f32 %v1159, 0.001143296
      %v1161 = vmul.f32 %v1147, %v1160
      %v1162 = vadd.f32 %v1161, 0.014752088
      %v1163 = vmul.f32 %v1147, %v1162
      %v1164 = vadd.f32 %v1163, 0.112945676
      %v1165 = vmul.f32 %v1147, %v1164
      %v1166 = vadd.f32 %v1165, 0.4994258
      %v1167 = vmul.f32 %v1147, %v1166
      %v1168 = vadd.f32 %v1167, 1.0
      %v1169 = vrcp.pop %v1168
      %v1170 = vmul.f32 %v1168, %v1169
      %v1171 = vsub.f32 1.0, %v1170
      %v1172 = vmul.f32 %v1169, %v1171
      %v1173 = vadd.f32 %v1169, %v1172
      %vm1174 = vweird.f32 %v1168
      %vm1175 = vweird.f32 %v1169
      %vm1176 = vmor %vm1174, %vm1175
      %v1177 = vsel %vm1176, %v1169, %v1173
      %v1178 = vand.u32 2147483647, %v1168
      %vm1179 = vcmp.eq.f32.partialorder %v1178, 8.507059e+37
      %v1180 = vand.u32 %v1168, 2147483648
      %v1181 = vor.u32 1.1754944e-38, %v1180
      %v1182 = vsel %vm1179, %v1181, %v1177
      %v1183 = vmul.f32 %v1158, %v1182
      %v1184 = vmin.f32 %v1183, 1.0
      %v1185 = vmax.f32 %v1184, -1.0
      %v1186 = vmul.f32 %v944, %v944
      %v1187 = vmin.f32 16.0, %v1186
      %v1188 = vmul.f32 %v1187, 2.1237322e-06
      %v1189 = vadd.f32 %v1188, 0.00028619796
      %v1190 = vmul.f32 %v1187, %v1189
      %v1191 = vadd.f32 %v1190, 0.0036580483
      %v1192 = vmul.f32 %v1187, %v1191
      %v1193 = vadd.f32 %v1192, 0.05243302
      %v1194 = vmul.f32 %v1187, %v1193
      %v1195 = vadd.f32 %v1194, 0.18741608
      %v1196 = vmul.f32 %v1187, %v1195
      %v1197 = vadd.f32 %v1196, 1.1283791
      %v1198 = vmul.f32 %v944, %v1197
      %v1199 = vmul.f32 %v1187, 3.8918573e-05
      %v1200 = vadd.f32 %v1199, 0.001143296
      %v1201 = vmul.f32 %v1187, %v1200
      %v1202 = vadd.f32 %v1201, 0.014752088
      %v1203 = vmul.f32 %v1187, %v1202
      %v1204 = vadd.f32 %v1203, 0.112945676
      %v1205 = vmul.f32 %v1187, %v1204
      %v1206 = vadd.f32 %v1205, 0.4994258
      %v1207 = vmul.f32 %v1187, %v1206
      %v1208 = vadd.f32 %v1207, 1.0
      %v1209 = vrcp.pop %v1208
      %v1210 = vmul.f32 %v1208, %v1209
      %v1211 = vsub.f32 1.0, %v1210
      %v1212 = vmul.f32 %v1209, %v1211
      %v1213 = vadd.f32 %v1209, %v1212
      %vm1214 = vweird.f32 %v1208
      %vm1215 = vweird.f32 %v1209
      %vm1216 = vmor %vm1214, %vm1215
      %v1217 = vsel %vm1216, %v1209, %v1213
      %v1218 = vand.u32 2147483647, %v1208
      %vm1219 = vcmp.eq.f32.partialorder %v1218, 8.507059e+37
      %v1220 = vand.u32 %v1208, 2147483648
      %v1221 = vor.u32 1.1754944e-38, %v1220
      %v1222 = vsel %vm1219, %v1221, %v1217
      %v1223 = vmul.f32 %v1198, %v1222
      %v1224 = vmin.f32 %v1223, 1.0
      %v1225 = vmax.f32 %v1224, -1.0
      %v1226 = vmul.f32 %v945, %v945
      %v1227 = vmin.f32 16.0, %v1226
      %v1228 = vmul.f32 %v1227, 2.1237322e-06
      %v1229 = vadd.f32 %v1228, 0.00028619796
      %v1230 = vmul.f32 %v1227, %v1229
      %v1231 = vadd.f32 %v1230, 0.0036580483
      %v1232 = vmul.f32 %v1227, %v1231
      %v1233 = vadd.f32 %v1232, 0.05243302
      %v1234 = vmul.f32 %v1227, %v1233
      %v1235 = vadd.f32 %v1234, 0.18741608
      %v1236 = vmul.f32 %v1227, %v1235
      %v1237 = vadd.f32 %v1236, 1.1283791
      %v1238 = vmul.f32 %v945, %v1237
      %v1239 = vmul.f32 %v1227, 3.8918573e-05
      %v1240 = vadd.f32 %v1239, 0.001143296
      %v1241 = vmul.f32 %v1227, %v1240
      %v1242 = vadd.f32 %v1241, 0.014752088
      %v1243 = vmul.f32 %v1227, %v1242
      %v1244 = vadd.f32 %v1243, 0.112945676
      %v1245 = vmul.f32 %v1227, %v1244
      %v1246 = vadd.f32 %v1245, 0.4994258
      %v1247 = vmul.f32 %v1227, %v1246
      %v1248 = vadd.f32 %v1247, 1.0
      %v1249 = vrcp.pop %v1248
      %v1250 = vmul.f32 %v1248, %v1249
      %v1251 = vsub.f32 1.0, %v1250
      %v1252 = vmul.f32 %v1249, %v1251
      %v1253 = vadd.f32 %v1249, %v1252
      %vm1254 = vweird.f32 %v1248
      %vm1255 = vweird.f32 %v1249
      %vm1256 = vmor %vm1254, %vm1255
      %v1257 = vsel %vm1256, %v1249, %v1253
      %v1258 = vand.u32 2147483647, %v1248
      %vm1259 = vcmp.eq.f32.partialorder %v1258, 8.507059e+37
      %v1260 = vand.u32 %v1248, 2147483648
      %v1261 = vor.u32 1.1754944e-38, %v1260
      %v1262 = vsel %vm1259, %v1261, %v1257
      %v1263 = vmul.f32 %v1238, %v1262
      %v1264 = vmin.f32 %v1263, 1.0
      %v1265 = vmax.f32 %v1264, -1.0
      %v1266 = vadd.f32 %v985, 1.0
      %v1267 = vadd.f32 %v1025, 1.0
      %v1268 = vadd.f32 %v1065, 1.0
      %v1269 = vadd.f32 %v1105, 1.0
      %v1270 = vadd.f32 %v1145, 1.0
      %v1271 = vadd.f32 %v1185, 1.0
      %v1272 = vadd.f32 %v1225, 1.0
      %v1273 = vadd.f32 %v1265, 1.0
      %v1274 = vmul.f32 %v930, %v1266
      %v1275 = vmul.f32 %v931, %v1267
      %v1276 = vmul.f32 %v932, %v1268
      %v1277 = vmul.f32 %v933, %v1269
      %v1278 = vmul.f32 %v934, %v1270
      %v1279 = vmul.f32 %v935, %v1271
      %v1280 = vmul.f32 %v936, %v1272
      %v1281 = vmul.f32 %v937, %v1273
      %1282 = vset.pattern.permute.xlu0 2
      %1283 = vperm.xlu0 %1282, %v173
      %v1284 = vpop.permute.xlu0 %1283
      %1286 = vset.pattern.permute.xlu0 2
      %1287 = vperm.xlu0 %1286, %v174
      %v1288 = vpop.permute.xlu0 %1287
      %1290 = vrot.lane.b32.xlu0 %v171, 80
      %v1291 = vpop.permute.xlu0 %1290
      %1292 = vrot.lane.b32.xlu0 %v172, 80
      %v1293 = vpop.permute.xlu0 %1292
      %v1294 = vsel %vm193, %v1291, 0
      %v1296 = vsel %vm193, %v1293, 0
      %1298 = vmatpush.msra.mxu0 0.0
      %1299 = vmatpush.msra.mxu0 0.0
      %1300 = vmatpush.msra.mxu0 0.0
      %1301 = vmatpush.msra.mxu0 0.0
      %1302 = vmatpush.msra.mxu0 0.0
      %1303 = vmatpush.msra.mxu0 0.0
      %1304 = vmatpush.msra.mxu0 0.0
      %1305 = vmatpush.msra.mxu0 0.0
      %1306 = vmatpush.msra.mxu0 0.0
      %1307 = vmatpush.msra.mxu0 0.0
      %1308 = vmatpush.msra.mxu0 0.0
      %1309 = vmatpush.msra.mxu0 0.0
      %1310 = vmatpush.msra.mxu0 0.0
      %1311 = vmatpush.msra.mxu0 0.0
      %1312 = vmatpush.msra.mxu0 %v1278
      %1313 = vmatpush.msra.mxu0 %v1274
      %1314 = vmatmul.f32.gmra.mxu0 %v1294
      %v1315 = vpop.f32.mrf.mxu0
      %v1316 = vadd.f32 %v1284, %v1315
      %1317 = vmatmul.f32.gmra.mxu0 %v1296
      %v1318 = vpop.f32.mrf.mxu0
      %v1319 = vadd.f32 %v1288, %v1318
      %1320 = vdwg.mxu0
      %1321 = vmatpush.msra.mxu0 0.0
      %1322 = vmatpush.msra.mxu0 0.0
      %1323 = vmatpush.msra.mxu0 0.0
      %1324 = vmatpush.msra.mxu0 0.0
      %1325 = vmatpush.msra.mxu0 0.0
      %1326 = vmatpush.msra.mxu0 0.0
      %1327 = vmatpush.msra.mxu0 0.0
      %1328 = vmatpush.msra.mxu0 0.0
      %1329 = vmatpush.msra.mxu0 0.0
      %1330 = vmatpush.msra.mxu0 0.0
      %1331 = vmatpush.msra.mxu0 0.0
      %1332 = vmatpush.msra.mxu0 0.0
      %1333 = vmatpush.msra.mxu0 0.0
      %1334 = vmatpush.msra.mxu0 0.0
      %1335 = vmatpush.msra.mxu0 %v1279
      %1336 = vmatpush.msra.mxu0 %v1275
      %1337 = vmatmul.f32.gmra.mxu0 %v1294
      %v1338 = vpop.f32.mrf.mxu0
      %v1339 = vadd.f32 %v1284, %v1338
      %1340 = vmatmul.f32.gmra.mxu0 %v1296
      %v1341 = vpop.f32.mrf.mxu0
      %v1342 = vadd.f32 %v1288, %v1341
      %1343 = vdwg.mxu0
      %1344 = vmatpush.msra.mxu0 0.0
      %1345 = vmatpush.msra.mxu0 0.0
      %1346 = vmatpush.msra.mxu0 0.0
      %1347 = vmatpush.msra.mxu0 0.0
      %1348 = vmatpush.msra.mxu0 0.0
      %1349 = vmatpush.msra.mxu0 0.0
      %1350 = vmatpush.msra.mxu0 0.0
      %1351 = vmatpush.msra.mxu0 0.0
      %1352 = vmatpush.msra.mxu0 0.0
      %1353 = vmatpush.msra.mxu0 0.0
      %1354 = vmatpush.msra.mxu0 0.0
      %1355 = vmatpush.msra.mxu0 0.0
      %1356 = vmatpush.msra.mxu0 0.0
      %1357 = vmatpush.msra.mxu0 0.0
      %1358 = vmatpush.msra.mxu0 %v1280
      %1359 = vmatpush.msra.mxu0 %v1276
      %1360 = vmatmul.f32.gmra.mxu0 %v1294
      %v1361 = vpop.f32.mrf.mxu0
      %v1362 = vadd.f32 %v1284, %v1361
      %1363 = vmatmul.f32.gmra.mxu0 %v1296
      %v1364 = vpop.f32.mrf.mxu0
      %v1365 = vadd.f32 %v1288, %v1364
      %1366 = vdwg.mxu0
      %1367 = vmatpush.msra.mxu0 0.0
      %1368 = vmatpush.msra.mxu0 0.0
      %1369 = vmatpush.msra.mxu0 0.0
      %1370 = vmatpush.msra.mxu0 0.0
      %1371 = vmatpush.msra.mxu0 0.0
      %1372 = vmatpush.msra.mxu0 0.0
      %1373 = vmatpush.msra.mxu0 0.0
      %1374 = vmatpush.msra.mxu0 0.0
      %1375 = vmatpush.msra.mxu0 0.0
      %1376 = vmatpush.msra.mxu0 0.0
      %1377 = vmatpush.msra.mxu0 0.0
      %1378 = vmatpush.msra.mxu0 0.0
      %1379 = vmatpush.msra.mxu0 0.0
      %1380 = vmatpush.msra.mxu0 0.0
      %1381 = vmatpush.msra.mxu0 %v1281
      %1382 = vmatpush.msra.mxu0 %v1277
      %1383 = vmatmul.f32.gmra.mxu0 %v1294
      %v1384 = vpop.f32.mrf.mxu0
      %v1385 = vadd.f32 %v1284, %v1384
      %1386 = vmatmul.f32.gmra.mxu0 %v1296
      %v1387 = vpop.f32.mrf.mxu0
      %v1388 = vadd.f32 %v1288, %v1387
      %1389 = vdwg.mxu0
      %v1390 = vadd.f32 %v1316, %v175
      %v1391 = vadd.f32 %v1339, %v176
      %v1392 = vadd.f32 %v1362, %v177
      %v1393 = vadd.f32 %v1385, %v178
      %v1394 = vadd.f32 %v1319, %v179
      %v1395 = vadd.f32 %v1342, %v180
      %v1396 = vadd.f32 %v1365, %v181
      %v1397 = vadd.f32 %v1388, %v182
      %1398 = vst [vmem:[%s170] sm:$0xff] %v1390
      %1399 = vst [vmem:[%s170 + $0x8] sm:$0xff] %v1391
      %1400 = vst [vmem:[%s170 + $0x10] sm:$0xff] %v1392
      %1401 = vst [vmem:[%s170 + $0x18] sm:$0xff] %v1393
      %1402 = vst [vmem:[%s170 + $0x20] sm:$0xff] %v1394
      %1403 = vst [vmem:[%s170 + $0x28] sm:$0xff] %v1395
      %1404 = vst [vmem:[%s170 + $0x30] sm:$0xff] %v1396
      %1405 = vst [vmem:[%s170 + $0x38] sm:$0xff] %v1397
      %p1406 = scmp.lt.s32.totalorder %s14, 1
      %s1407 = scalar_select %p1406, %s14, 1
      %s1408 = smul.addr %s1407, 8
      %s1409 = smul.addr %s1408, 8
      %s1410 = scalar_lea.vmem %s3, %s1409
      // Predicated region
      $region33: #{grapher_forward.1} parent=31 // pred_check
        %p1411 = pneg %p100
      $region34: #{grapher_forward.1} parent=31 // pred_check_branch
        %1413 = sbr.rel (%p1411) target = $region36
      $region35: #{grapher_forward.1} parent=31 // pred_region
        _
      $region36: #{grapher_forward.1} parent=31 // pred_fallthru
        _
    $region32: #{grapher_forward.1} parent=5 // pred_fallthru
      _
    %p1414 = scmp.le.s32.totalorder 2, %s9
    // Predicated region
    $region37: #{grapher_forward.1} parent=5 // pred_check
      %p1415 = pneg %p1414
    $region38: #{grapher_forward.1} parent=5 // pred_check_branch
      %1417 = sbr.rel (%p1415) target = $region40
    $region39: #{grapher_forward.1} parent=5 // pred_region
      %s1418 = ssub.s32 %s9, 2
      // Predicated region
      $region41: #{grapher_forward.1} parent=39 // pred_check
        %p1419 = pneg %p106
      $region42: #{grapher_forward.1} parent=39 // pred_check_branch
        %1421 = sbr.rel (%p1419) target = $region44
      $region43: #{grapher_forward.1} parent=39 // pred_region
        %p1422 = scmp.lt.s32.totalorder %s15, 1
        %s1423 = scalar_select %p1422, %s15, 1
        %s1424 = smul.addr %s1423, 8
        %s1425 = smul.addr %s1424, 8
        %s1426 = scalar_lea.vmem %s3, %s1425
      $region44: #{grapher_forward.1} parent=39 // pred_fallthru
        _
    $region40: #{grapher_forward.1} parent=5 // pred_fallthru
      _
  $region6: #{grapher_forward.1} parent=0 // loop_footer
    %s13 = sadd.s32 1, %s9
  $region7: #{grapher_forward.1} parent=0 // loop_footer_branch
    %8 = sbr.rel target = $region3
  $region8: #{grapher_forward.1} parent=0 // loop_exit
    _

</llo_original>
